<compile_context>
chip_gen: v7x
topology: tpu7x:2x2x1
jax: 0.10.0
libtpu: 0.0.40
codegen_flags: <defaults>
</compile_context>

<pallas_src>
import functools

import jax
import jax.numpy as jnp
from jax import lax
from jax.experimental import pallas as pl
from jax.experimental.pallas import tpu as pltpu


def _round_up(x, m):
    return ((x + m - 1) // m) * m


# ---------------------------------------------------------------------------
# Pallas kernel: tiled  out = [relu](x @ w + b)
# grid = (M/tm, N/tn, K/tk); K is the reduction ("arbitrary") axis.
# nk is static; when nk == 1 there is no accumulator logic at all.
# ---------------------------------------------------------------------------
def _mm_bias_kernel(apply_relu, nk, x_ref, w_ref, b_ref, o_ref):
    partial = jnp.dot(x_ref[...], w_ref[...], preferred_element_type=jnp.float32)
    if nk == 1:
        y = partial + b_ref[...]            # (tm, tn) + (1, tn) broadcast
        if apply_relu:
            y = jnp.maximum(y, 0.0)
        o_ref[...] = y.astype(o_ref.dtype)
    else:
        k = pl.program_id(2)

        @pl.when(k == 0)
        def _():
            o_ref[...] = partial

        @pl.when(k > 0)
        def _():
            o_ref[...] += partial

        @pl.when(k == nk - 1)
        def _():
            y = o_ref[...] + b_ref[...]
            if apply_relu:
                y = jnp.maximum(y, 0.0)
            o_ref[...] = y


def matmul_bias(x, w, b, *, relu, tm_max=2048, tk_max=2048):
    """out = relu?(x @ w + b), x:(M,K), w:(K,N), b:(N,) -> (M,N) float32.

    bf16 operands / f32 accumulation; tiles adapt to the real problem size.
    """
    M, K = x.shape
    K2, N = w.shape
    assert K == K2 and b.shape == (N,)

    Np = _round_up(N, 128)
    tn = 128                                   # Np is always a multiple of 128
    tk = min(tk_max, _round_up(K, 128))
    Kp = _round_up(_round_up(K, 128), tk)
    nk = Kp // tk
    tm = _round_up(M, 8)
    if tm > tm_max:
        tm = tm_max
    Mp = _round_up(M, tm)

    xp = jnp.pad(x.astype(jnp.bfloat16), ((0, Mp - M), (0, Kp - K)))
    wp = jnp.pad(w.astype(jnp.bfloat16), ((0, Kp - K), (0, Np - N)))
    bp = jnp.pad(b.astype(jnp.float32).reshape(1, N), ((0, 0), (0, Np - N)))

    kernel = functools.partial(_mm_bias_kernel, relu, nk)

    out = pl.pallas_call(
        kernel,
        out_shape=jax.ShapeDtypeStruct((Mp, Np), jnp.float32),
        grid_spec=pltpu.PrefetchScalarGridSpec(
            num_scalar_prefetch=0,
            grid=(Mp // tm, Np // tn, nk),
            in_specs=[
                pl.BlockSpec((tm, tk), lambda i, j, k: (i, k)),
                pl.BlockSpec((tk, tn), lambda i, j, k: (k, j)),
                pl.BlockSpec((1, tn), lambda i, j, k: (0, j)),
            ],
            out_specs=pl.BlockSpec((tm, tn), lambda i, j, k: (i, j)),
        ),
        compiler_params=pltpu.CompilerParams(
            dimension_semantics=("parallel", "parallel", "arbitrary")
        ),
    )(xp, wp, bp)
    return out[:M, :N]


# ---------------------------------------------------------------------------
# Fused MLP head:  out = relu(x @ w1 + b1) @ w2 + b2   (fc1 + relu + fc2)
# grid = (K/tk,): fc1 accumulates over K in a resident f32 scratch; the tiny
# fc2 matmul runs in the last-K epilogue, avoiding a second pallas_call.
# ---------------------------------------------------------------------------
def _mlp_head_kernel(nk, x_ref, w1_ref, b1_ref, w2_ref, b2_ref, o_ref, acc_ref):
    k = pl.program_id(0)

    @pl.when(k == 0)
    def _():
        acc_ref[...] = jnp.zeros_like(acc_ref)

    acc_ref[...] += jnp.dot(
        x_ref[...], w1_ref[...], preferred_element_type=jnp.float32
    )

    @pl.when(k == nk - 1)
    def _():
        h = jnp.maximum(acc_ref[...] + b1_ref[...], 0.0)            # (Mp, Hp) f32
        y = jnp.dot(h, w2_ref[...], preferred_element_type=jnp.float32)
        o_ref[...] = (y + b2_ref[...]).astype(o_ref.dtype)


def mlp_head(flat, w1, b1, w2, b2, *, tk=7168):
    """relu(flat @ w1 + b1) @ w2 + b2.

    flat: (B, K) f32, w1: (K, H) bf16 (pre-transposed), w2: (H, N) f32.
    """
    B, K = flat.shape
    K2, H = w1.shape
    H2, N = w2.shape
    assert K == K2 and H == H2 and b1.shape == (H,) and b2.shape == (N,)

    Mp = _round_up(B, 8)
    Hp = _round_up(H, 128)
    Np = _round_up(N, 128)
    tk = min(tk, _round_up(K, 128))
    Kp = _round_up(_round_up(K, 128), tk)
    nk = Kp // tk

    xp = jnp.pad(flat.astype(jnp.bfloat16), ((0, Mp - B), (0, Kp - K)))
    w1p = jnp.pad(w1.astype(jnp.bfloat16), ((0, Kp - K), (0, Hp - H)))
    b1p = jnp.pad(b1.astype(jnp.float32).reshape(1, H), ((0, 0), (0, Hp - H)))
    w2p = jnp.pad(w2.astype(jnp.float32), ((0, Hp - H), (0, Np - N)))
    b2p = jnp.pad(b2.astype(jnp.float32).reshape(1, N), ((0, 0), (0, Np - N)))

    out = pl.pallas_call(
        functools.partial(_mlp_head_kernel, nk),
        out_shape=jax.ShapeDtypeStruct((Mp, Np), jnp.float32),
        grid_spec=pltpu.PrefetchScalarGridSpec(
            num_scalar_prefetch=0,
            grid=(nk,),
            in_specs=[
                pl.BlockSpec((Mp, tk), lambda k: (0, k)),
                pl.BlockSpec((tk, Hp), lambda k: (k, 0)),
                pl.BlockSpec((1, Hp), lambda k: (0, 0)),
                pl.BlockSpec((Hp, Np), lambda k: (0, 0)),
                pl.BlockSpec((1, Np), lambda k: (0, 0)),
            ],
            out_specs=pl.BlockSpec((Mp, Np), lambda k: (0, 0)),
            scratch_shapes=[pltpu.VMEM((Mp, Hp), jnp.float32)],
        ),
        compiler_params=pltpu.CompilerParams(
            dimension_semantics=("arbitrary",)
        ),
    )(xp, w1p, b1p, w2p, b2p)
    return out[:B, :N]


# ---------------------------------------------------------------------------
# Conv2d(k=3, pad=1, stride=1) as im2col + Pallas matmul (NHWC activations)
# ---------------------------------------------------------------------------
def _im2col_3x3_nhwc(x):
    # x: (B, H, W, C) -> (B*H*W, C*9), feature order (c, dy, dx)
    B, H, W, C = x.shape
    xp = jnp.pad(x, ((0, 0), (1, 1), (1, 1), (0, 0)))
    taps = [xp[:, dy:dy + H, dx:dx + W, :] for dy in range(3) for dx in range(3)]
    p = jnp.stack(taps, axis=-1)           # (B, H, W, C, 9)
    return p.reshape(B * H * W, C * 9)


def conv3x3_relu_nhwc(x, w, b):
    # x: (B, H, W, Cin) NHWC, w: (Cout, Cin, 3, 3) [PyTorch layout], b: (Cout,)
    B, H, W, Cin = x.shape
    Cout = w.shape[0]
    cols = _im2col_3x3_nhwc(x)                       # (B*H*W, Cin*9)
    wm = w.reshape(Cout, Cin * 9).T                  # (Cin*9, Cout) -- tiny
    y = matmul_bias(cols, wm, b, relu=True)          # (B*H*W, Cout)
    return y.reshape(B, H, W, Cout)                  # stay NHWC


# ---------------------------------------------------------------------------
# PNN parameters + forward
# ---------------------------------------------------------------------------
def init_pnn_params(key, shared_dim=128, output_dim_A=10, output_dim_B=2):
    ks = jax.random.split(key, 12)
    feat = 64 * 28 * 28
    # fc weights are stored as (in_features, out_features) -- i.e. pre-transposed
    # relative to PyTorch's (out, in) -- so no runtime .T copy is needed.
    # fc1 weights are kept in bf16 since they only feed the bf16 MXU path.
    p = {
        "conv1_w": jax.random.normal(ks[0], (32, 1, 3, 3), jnp.float32) * 0.1,
        "conv1_b": jax.random.normal(ks[1], (32,), jnp.float32) * 0.1,
        "conv2_w": jax.random.normal(ks[2], (64, 32, 3, 3), jnp.float32) * 0.05,
        "conv2_b": jax.random.normal(ks[3], (64,), jnp.float32) * 0.05,
        "fc1_A_w": (jax.random.normal(ks[4], (feat, shared_dim), jnp.float32) * 1e-3
                    ).astype(jnp.bfloat16),
        "fc1_A_b": jax.random.normal(ks[5], (shared_dim,), jnp.float32) * 0.01,
        "fc2_A_w": jax.random.normal(ks[6], (shared_dim, output_dim_A), jnp.float32) * 0.05,
        "fc2_A_b": jax.random.normal(ks[7], (output_dim_A,), jnp.float32) * 0.01,
        "fc1_B_w": (jax.random.normal(ks[8], (feat, shared_dim), jnp.float32) * 1e-3
                    ).astype(jnp.bfloat16),
        "fc1_B_b": jax.random.normal(ks[9], (shared_dim,), jnp.float32) * 0.01,
        "fc2_B_w": jax.random.normal(ks[10], (shared_dim, output_dim_B), jnp.float32) * 0.05,
        "fc2_B_b": jax.random.normal(ks[11], (output_dim_B,), jnp.float32) * 0.01,
    }
    return p


def pnn_forward(params, x, task_id):
    # x: (B, 1, 28, 28) NCHW float32; task_id: 1-D int array. The branch is a
    # static host-side decision, mirroring PyTorch's eager `if task_id[0] == 1`.
    B = x.shape[0]
    h = jnp.transpose(x, (0, 2, 3, 1))                               # NCHW -> NHWC once
    h = conv3x3_relu_nhwc(h, params["conv1_w"], params["conv1_b"])   # (B,28,28,32)
    h = conv3x3_relu_nhwc(h, params["conv2_w"], params["conv2_b"])   # (B,28,28,64)
    # PyTorch x.view(B, -1) flattens in (C, H, W) order -> one transpose here.
    flat = jnp.transpose(h, (0, 3, 1, 2)).reshape(B, 64 * 28 * 28)

    if int(task_id[0]) == 1:
        return mlp_head(flat, params["fc1_A_w"], params["fc1_A_b"],
                        params["fc2_A_w"], params["fc2_A_b"])
    else:
        return mlp_head(flat, params["fc1_B_w"], params["fc1_B_b"],
                        params["fc2_B_w"], params["fc2_B_b"])


# ---------------------------------------------------------------------------
# Pure-JAX reference (loose numerical sanity check; bf16 rounding in kernels)
# ---------------------------------------------------------------------------
def pnn_forward_ref(params, x, task_id):
    def conv(x, w, b):
        y = lax.conv_general_dilated(
            x, w, window_strides=(1, 1), padding="SAME",
            dimension_numbers=("NCHW", "OIHW", "NCHW"))
        return jnp.maximum(y + b[None, :, None, None], 0.0)

    B = x.shape[0]
    h = conv(x, params["conv1_w"], params["conv1_b"])
    h = conv(h, params["conv2_w"], params["conv2_b"])
    flat = h.reshape(B, -1)
    if int(task_id[0]) == 1:
        w1, b1 = params["fc1_A_w"], params["fc1_A_b"]
        w2, b2 = params["fc2_A_w"], params["fc2_A_b"]
    else:
        w1, b1 = params["fc1_B_w"], params["fc1_B_b"]
        w2, b2 = params["fc2_B_w"], params["fc2_B_b"]
    hh = jnp.maximum(flat @ w1.astype(jnp.float32) + b1, 0.0)
    return hh @ w2 + b2


if __name__ == "__main__":
    key = jax.random.PRNGKey(0)
    k_param, k_x = jax.random.split(key)

    params = init_pnn_params(k_param)
    # Spatial size must be 28x28 (fc1 expects 64*28*28 features); batch kept small.
    x = jax.random.normal(k_x, (2, 1, 28, 28), jnp.float32)
    task_id_A = jnp.array([1, 1], dtype=jnp.int32)
    task_id_B = jnp.array([2, 2], dtype=jnp.int32)

    out_A = jax.block_until_ready(pnn_forward(params, x, task_id_A))  # (2, 10)
    out_B = jax.block_until_ready(pnn_forward(params, x, task_id_B))  # (2, 2)
    assert out_A.shape == (2, 10) and out_B.shape == (2, 2)

    ref_A = pnn_forward_ref(params, x, task_id_A)
    ref_B = pnn_forward_ref(params, x, task_id_B)
    rel_A = jnp.max(jnp.abs(out_A - ref_A)) / (jnp.max(jnp.abs(ref_A)) + 1e-6)
    rel_B = jnp.max(jnp.abs(out_B - ref_B)) / (jnp.max(jnp.abs(ref_B)) + 1e-6)
    assert float(rel_A) < 5e-2 and float(rel_B) < 5e-2, (float(rel_A), float(rel_B))

    print("KERNEL_OK")
</pallas_src>

<mosaic_0001>
module attributes {stable_mosaic.version = 11 : i64} {
  func.func @_mm_bias_kernel(%arg0: i32, %arg1: i32, %arg2: i32, %arg3: memref<1568x128xbf16, #tpu.memory_space<vmem>>, %arg4: memref<128x128xbf16, #tpu.memory_space<vmem>>, %arg5: memref<1x128xf32, #tpu.memory_space<vmem>>, %arg6: memref<1568x128xf32, #tpu.memory_space<vmem>>) attributes {dimension_semantics = [#tpu.dimension_semantics<parallel>, #tpu.dimension_semantics<parallel>, #tpu.dimension_semantics<arbitrary>], iteration_bounds = array<i64: 1, 1, 1>, scalar_prefetch = 0 : i64, scratch_operands = 0 : i64, tpu.core_type = #tpu.core_type<tc>, window_params = [{transform_indices = @transform_0, window_bounds = array<i64: 1568, 128>}, {transform_indices = @transform_1, window_bounds = array<i64: 128, 128>}, {transform_indices = @transform_2, window_bounds = array<i64: 1, 128>}, {transform_indices = @transform_3, window_bounds = array<i64: 1568, 128>}]} {
    %c0 = arith.constant 0 : index
    %c0_0 = arith.constant 0 : index
    %0 = vector.load %arg3[%c0, %c0_0] : memref<1568x128xbf16, #tpu.memory_space<vmem>>, vector<1568x128xbf16>
    %c0_1 = arith.constant 0 : index
    %c0_2 = arith.constant 0 : index
    %1 = vector.load %arg4[%c0_1, %c0_2] : memref<128x128xbf16, #tpu.memory_space<vmem>>, vector<128x128xbf16>
    %cst = arith.constant dense<0.000000e+00> : vector<1568x128xf32>
    %2 = tpu.matmul %0, %1, %cst {dimension_numbers = #tpu.dot_dimension_numbers<[1], [0], [0], [1], [0, 0, 1, 1], [], []>} : vector<1568x128xbf16>, vector<128x128xbf16>, vector<1568x128xf32> -> vector<1568x128xf32>
    %c0_3 = arith.constant 0 : index
    %c0_4 = arith.constant 0 : index
    %3 = vector.load %arg5[%c0_3, %c0_4] : memref<1x128xf32, #tpu.memory_space<vmem>>, vector<1x128xf32>
    %4 = vector.broadcast %3 : vector<1x128xf32> to vector<1568x128xf32>
    %5 = arith.addf %2, %4 : vector<1568x128xf32>
    %cst_5 = arith.constant 0.000000e+00 : f32
    %6 = vector.broadcast %cst_5 : f32 to vector<1568x128xf32>
    %7 = arith.maximumf %5, %6 : vector<1568x128xf32>
    %c0_6 = arith.constant 0 : index
    %c0_7 = arith.constant 0 : index
    %8 = vector.load %arg6[%c0_6, %c0_7] : memref<1568x128xf32, #tpu.memory_space<vmem>>, vector<1568x128xf32>
    tpu.vector_store %arg6[%c0_6, %c0_7], %7 {strides = array<i32>} : memref<1568x128xf32, #tpu.memory_space<vmem>>, vector<1568x128xf32>,
    return
  }
  func.func @transform_0(%arg0: i32, %arg1: i32, %arg2: i32) -> (i32, i32) {
    %c0_i32 = arith.constant 0 : i32
    return %arg0, %arg2 : i32, i32
  }
  func.func @transform_1(%arg0: i32, %arg1: i32, %arg2: i32) -> (i32, i32) {
    %c0_i32 = arith.constant 0 : i32
    return %arg2, %arg1 : i32, i32
  }
  func.func @transform_2(%arg0: i32, %arg1: i32, %arg2: i32) -> (i32, i32) {
    %c0_i32 = arith.constant 0 : i32
    %c0_i32_0 = arith.constant 0 : i32
    return %c0_i32, %arg1 : i32, i32
  }
  func.func @transform_3(%arg0: i32, %arg1: i32, %arg2: i32) -> (i32, i32) {
    %c0_i32 = arith.constant 0 : i32
    return %arg0, %arg1 : i32, i32
  }
}

</mosaic_0001>

<llo_original>
// kernel: tpu_custom_call.1
$region0: #{tpu_custom_call.1}
  #allocation0 [shape = 'u32[]', space=smem, size = 0x4, offset = 0x4, fixed_abs, tag = 'smem constant byte address 0x4 - core index']
  #allocation1 [shape = 'u32[144,128]{1,0:T(1,128)}', space=vmem, size = 0x12000, scoped, tag = 'internal scratch']
  %s0 = inlined_call_operand.hbm [shape: bf16[1568,128], index: 0, kind: input, shape index: {}]
  %s1 = inlined_call_operand.hbm [shape: bf16[128,128], index: 1, kind: input, shape index: {}]
  %s2 = inlined_call_operand.vmem [shape: f32[1,128], index: 2, kind: input, shape index: {}]
  %s3 = inlined_call_operand.hbm [shape: f32[1568,128], index: 3, kind: output, shape index: {}]
  %s4 = sld [smem:[#allocation0]]
  $region30: #{tpu_custom_call.1} parent=0
    _
  %s6 = ssub.s32 1, %s4
  %s7 = scalar_select 0, %s6, %s4
  $region1: #{tpu_custom_call.1} parent=0
    #allocation2 [shape = 'u8[401408]{0}', space=vmem, size = 0x62000, scoped, tag = 'input window, operand 0, single buffered']
    #allocation3 [shape = 's32[1]{0}', space=sflag, size = 0x4, scoped, tag = 'scoped memory for tpu_custom_call.1']
    #allocation4 [shape = 's32[1]{0}', space=sflag, size = 0x4, scoped, tag = 'scoped memory for tpu_custom_call.1']
    #allocation5 [shape = 'u8[32768]{0}', space=vmem, size = 0x8000, scoped, tag = 'input window, operand 1, single buffered']
    #allocation6 [shape = 's32[1]{0}', space=sflag, size = 0x4, scoped, tag = 'scoped memory for tpu_custom_call.1']
    #allocation7 [shape = 'u8[802816]{0}', space=vmem, size = 0xc4000, scoped, tag = 'output window, operand 0, single buffered']
    %8 = vsyncpa [#allocation3], 0
    %9 = vsyncpa [#allocation6], 0
    %10 = vsyncpa [#allocation4], 0
    // Predicated region
    $region2: #{tpu_custom_call.1} parent=1 // pred_check
      _
    $region3: #{tpu_custom_call.1} parent=1 // pred_check_branch
      %12 = sbr.rel (0) target = $region5
    $region4: #{tpu_custom_call.1} parent=1 // pred_region
      %s14 = ssub.s32 12544, 12544
      %15 = vsyncadd [#allocation3], %s14
      %s16 = sshll.u32 [#allocation2], 4
      %s17 = int_to_ptr.vmem [resolvable:$true] %s16
      %22 = dma.hbm_to_vmem [thread:$0]  %s0, 12544, %s17, [#allocation3], 64, 64, 4
    $region5: #{tpu_custom_call.1} parent=1 // pred_fallthru
      _
    // Predicated region
    $region6: #{tpu_custom_call.1} parent=1 // pred_check
      _
    $region7: #{tpu_custom_call.1} parent=1 // pred_check_branch
      %24 = sbr.rel (0) target = $region9
    $region8: #{tpu_custom_call.1} parent=1 // pred_region
      %s26 = ssub.s32 1024, 1024
      %27 = vsyncadd [#allocation6], %s26
      %s28 = sshll.u32 [#allocation5], 4
      %s29 = int_to_ptr.vmem [resolvable:$true] %s28
      %34 = dma.hbm_to_vmem [thread:$0]  %s1, 1024, %s29, [#allocation6], 64, 64, 4
    $region9: #{tpu_custom_call.1} parent=1 // pred_fallthru
      _
    // Predicated region
    $region10: #{tpu_custom_call.1} parent=1 // pred_check
      _
    $region11: #{tpu_custom_call.1} parent=1 // pred_check_branch
      %36 = sbr.rel (0) target = $region13
    $region12: #{tpu_custom_call.1} parent=1 // pred_region
      _
    $region13: #{tpu_custom_call.1} parent=1 // pred_fallthru
      _
    // Predicated region
    $region14: #{tpu_custom_call.1} parent=1 // pred_check
      _
    $region15: #{tpu_custom_call.1} parent=1 // pred_check_branch
      %38 = sbr.rel (0) target = $region17
    $region16: #{tpu_custom_call.1} parent=1 // pred_region
      %39 = dma.done [#allocation3], 12544
    $region17: #{tpu_custom_call.1} parent=1 // pred_fallthru
      _
    // Predicated region
    $region18: #{tpu_custom_call.1} parent=1 // pred_check
      _
    $region19: #{tpu_custom_call.1} parent=1 // pred_check_branch
      %41 = sbr.rel (0) target = $region21
    $region20: #{tpu_custom_call.1} parent=1 // pred_region
      %42 = dma.done [#allocation6], 1024
    $region21: #{tpu_custom_call.1} parent=1 // pred_fallthru
      _
    %v44 = vld [vmem:[#allocation2] sm:$0xf]
    %v45 = vld [vmem:[#allocation2 + $0x4] sm:$0xf]
    %v46 = vld [vmem:[#allocation2 + $0x8] sm:$0xf]
    %v47 = vld [vmem:[#allocation2 + $0xc] sm:$0xf]
    %v48 = vld [vmem:[#allocation2 + $0x10] sm:$0xf]
    %v49 = vld [vmem:[#allocation2 + $0x14] sm:$0xf]
    %v50 = vld [vmem:[#allocation2 + $0x18] sm:$0xf]
    %v51 = vld [vmem:[#allocation2 + $0x1c] sm:$0xf]
    %v52 = vld [vmem:[#allocation2 + $0x20] sm:$0xf]
    %v53 = vld [vmem:[#allocation2 + $0x24] sm:$0xf]
    %v54 = vld [vmem:[#allocation2 + $0x28] sm:$0xf]
    %v55 = vld [vmem:[#allocation2 + $0x2c] sm:$0xf]
    %v56 = vld [vmem:[#allocation2 + $0x30] sm:$0xf]
    %v57 = vld [vmem:[#allocation2 + $0x34] sm:$0xf]
    %v58 = vld [vmem:[#allocation2 + $0x38] sm:$0xf]
    %v59 = vld [vmem:[#allocation2 + $0x3c] sm:$0xf]
    %v60 = vld [vmem:[#allocation2 + $0x40] sm:$0xf]
    %v61 = vld [vmem:[#allocation2 + $0x44] sm:$0xf]
    %v62 = vld [vmem:[#allocation2 + $0x48] sm:$0xf]
    %v63 = vld [vmem:[#allocation2 + $0x4c] sm:$0xf]
    %v64 = vld [vmem:[#allocation2 + $0x50] sm:$0xf]
    %v65 = vld [vmem:[#allocation2 + $0x54] sm:$0xf]
    %v66 = vld [vmem:[#allocation2 + $0x58] sm:$0xf]
    %v67 = vld [vmem:[#allocation2 + $0x5c] sm:$0xf]
    %v68 = vld [vmem:[#allocation2 + $0x60] sm:$0xf]
    %v69 = vld [vmem:[#allocation2 + $0x64] sm:$0xf]
    %v70 = vld [vmem:[#allocation2 + $0x68] sm:$0xf]
    %v71 = vld [vmem:[#allocation2 + $0x6c] sm:$0xf]
    %v72 = vld [vmem:[#allocation2 + $0x70] sm:$0xf]
    %v73 = vld [vmem:[#allocation2 + $0x74] sm:$0xf]
    %v74 = vld [vmem:[#allocation2 + $0x78] sm:$0xf]
    %v75 = vld [vmem:[#allocation2 + $0x7c] sm:$0xf]
    %v76 = vld [vmem:[#allocation2 + $0x80] sm:$0xf]
    %v77 = vld [vmem:[#allocation2 + $0x84] sm:$0xf]
    %v78 = vld [vmem:[#allocation2 + $0x88] sm:$0xf]
    %v79 = vld [vmem:[#allocation2 + $0x8c] sm:$0xf]
    %v80 = vld [vmem:[#allocation2 + $0x90] sm:$0xf]
    %v81 = vld [vmem:[#allocation2 + $0x94] sm:$0xf]
    %v82 = vld [vmem:[#allocation2 + $0x98] sm:$0xf]
    %v83 = vld [vmem:[#allocation2 + $0x9c] sm:$0xf]
    %v84 = vld [vmem:[#allocation2 + $0xa0] sm:$0xf]
    %v85 = vld [vmem:[#allocation2 + $0xa4] sm:$0xf]
    %v86 = vld [vmem:[#allocation2 + $0xa8] sm:$0xf]
    %v87 = vld [vmem:[#allocation2 + $0xac] sm:$0xf]
    %v88 = vld [vmem:[#allocation2 + $0xb0] sm:$0xf]
    %v89 = vld [vmem:[#allocation2 + $0xb4] sm:$0xf]
    %v90 = vld [vmem:[#allocation2 + $0xb8] sm:$0xf]
    %v91 = vld [vmem:[#allocation2 + $0xbc] sm:$0xf]
    %v92 = vld [vmem:[#allocation2 + $0xc0] sm:$0xf]
    %v93 = vld [vmem:[#allocation2 + $0xc4] sm:$0xf]
    %v94 = vld [vmem:[#allocation2 + $0xc8] sm:$0xf]
    %v95 = vld [vmem:[#allocation2 + $0xcc] sm:$0xf]
    %v96 = vld [vmem:[#allocation2 + $0xd0] sm:$0xf]
    %v97 = vld [vmem:[#allocation2 + $0xd4] sm:$0xf]
    %v98 = vld [vmem:[#allocation2 + $0xd8] sm:$0xf]
    %v99 = vld [vmem:[#allocation2 + $0xdc] sm:$0xf]
    %v100 = vld [vmem:[#allocation2 + $0xe0] sm:$0xf]
    %v101 = vld [vmem:[#allocation2 + $0xe4] sm:$0xf]
    %v102 = vld [vmem:[#allocation2 + $0xe8] sm:$0xf]
    %v103 = vld [vmem:[#allocation2 + $0xec] sm:$0xf]
    %v104 = vld [vmem:[#allocation2 + $0xf0] sm:$0xf]
    %v105 = vld [vmem:[#allocation2 + $0xf4] sm:$0xf]
    %v106 = vld [vmem:[#allocation2 + $0xf8] sm:$0xf]
    %v107 = vld [vmem:[#allocation2 + $0xfc] sm:$0xf]
    %v108 = vld [vmem:[#allocation2 + $0x100] sm:$0xf]
    %v109 = vld [vmem:[#allocation2 + $0x104] sm:$0xf]
    %v110 = vld [vmem:[#allocation2 + $0x108] sm:$0xf]
    %v111 = vld [vmem:[#allocation2 + $0x10c] sm:$0xf]
    %v112 = vld [vmem:[#allocation2 + $0x110] sm:$0xf]
    %v113 = vld [vmem:[#allocation2 + $0x114] sm:$0xf]
    %v114 = vld [vmem:[#allocation2 + $0x118] sm:$0xf]
    %v115 = vld [vmem:[#allocation2 + $0x11c] sm:$0xf]
    %v116 = vld [vmem:[#allocation2 + $0x120] sm:$0xf]
    %v117 = vld [vmem:[#allocation2 + $0x124] sm:$0xf]
    %v118 = vld [vmem:[#allocation2 + $0x128] sm:$0xf]
    %v119 = vld [vmem:[#allocation2 + $0x12c] sm:$0xf]
    %v120 = vld [vmem:[#allocation2 + $0x130] sm:$0xf]
    %v121 = vld [vmem:[#allocation2 + $0x134] sm:$0xf]
    %v122 = vld [vmem:[#allocation2 + $0x138] sm:$0xf]
    %v123 = vld [vmem:[#allocation2 + $0x13c] sm:$0xf]
    %v124 = vld [vmem:[#allocation2 + $0x140] sm:$0xf]
    %v125 = vld [vmem:[#allocation2 + $0x144] sm:$0xf]
    %v126 = vld [vmem:[#allocation2 + $0x148] sm:$0xf]
    %v127 = vld [vmem:[#allocation2 + $0x14c] sm:$0xf]
    %v128 = vld [vmem:[#allocation2 + $0x150] sm:$0xf]
    %v129 = vld [vmem:[#allocation2 + $0x154] sm:$0xf]
    %v130 = vld [vmem:[#allocation2 + $0x158] sm:$0xf]
    %v131 = vld [vmem:[#allocation2 + $0x15c] sm:$0xf]
    %v132 = vld [vmem:[#allocation2 + $0x160] sm:$0xf]
    %v133 = vld [vmem:[#allocation2 + $0x164] sm:$0xf]
    %v134 = vld [vmem:[#allocation2 + $0x168] sm:$0xf]
    %v135 = vld [vmem:[#allocation2 + $0x16c] sm:$0xf]
    %v136 = vld [vmem:[#allocation2 + $0x170] sm:$0xf]
    %v137 = vld [vmem:[#allocation2 + $0x174] sm:$0xf]
    %v138 = vld [vmem:[#allocation2 + $0x178] sm:$0xf]
    %v139 = vld [vmem:[#allocation2 + $0x17c] sm:$0xf]
    %v140 = vld [vmem:[#allocation2 + $0x180] sm:$0xf]
    %v141 = vld [vmem:[#allocation2 + $0x184] sm:$0xf]
    %v142 = vld [vmem:[#allocation2 + $0x188] sm:$0xf]
    %v143 = vld [vmem:[#allocation2 + $0x18c] sm:$0xf]
    %v144 = vld [vmem:[#allocation2 + $0x190] sm:$0xf]
    %v145 = vld [vmem:[#allocation2 + $0x194] sm:$0xf]
    %v146 = vld [vmem:[#allocation2 + $0x198] sm:$0xf]
    %v147 = vld [vmem:[#allocation2 + $0x19c] sm:$0xf]
    %v148 = vld [vmem:[#allocation2 + $0x1a0] sm:$0xf]
    %v149 = vld [vmem:[#allocation2 + $0x1a4] sm:$0xf]
    %v150 = vld [vmem:[#allocation2 + $0x1a8] sm:$0xf]
    %v151 = vld [vmem:[#allocation2 + $0x1ac] sm:$0xf]
    %v152 = vld [vmem:[#allocation2 + $0x1b0] sm:$0xf]
    %v153 = vld [vmem:[#allocation2 + $0x1b4] sm:$0xf]
    %v154 = vld [vmem:[#allocation2 + $0x1b8] sm:$0xf]
    %v155 = vld [vmem:[#allocation2 + $0x1bc] sm:$0xf]
    %v156 = vld [vmem:[#allocation2 + $0x1c0] sm:$0xf]
    %v157 = vld [vmem:[#allocation2 + $0x1c4] sm:$0xf]
    %v158 = vld [vmem:[#allocation2 + $0x1c8] sm:$0xf]
    %v159 = vld [vmem:[#allocation2 + $0x1cc] sm:$0xf]
    %v160 = vld [vmem:[#allocation2 + $0x1d0] sm:$0xf]
    %v161 = vld [vmem:[#allocation2 + $0x1d4] sm:$0xf]
    %v162 = vld [vmem:[#allocation2 + $0x1d8] sm:$0xf]
    %v163 = vld [vmem:[#allocation2 + $0x1dc] sm:$0xf]
    %v164 = vld [vmem:[#allocation2 + $0x1e0] sm:$0xf]
    %v165 = vld [vmem:[#allocation2 + $0x1e4] sm:$0xf]
    %v166 = vld [vmem:[#allocation2 + $0x1e8] sm:$0xf]
    %v167 = vld [vmem:[#allocation2 + $0x1ec] sm:$0xf]
    %v168 = vld [vmem:[#allocation2 + $0x1f0] sm:$0xf]
    %v169 = vld [vmem:[#allocation2 + $0x1f4] sm:$0xf]
    %v170 = vld [vmem:[#allocation2 + $0x1f8] sm:$0xf]
    %v171 = vld [vmem:[#allocation2 + $0x1fc] sm:$0xf]
    %v172 = vld [vmem:[#allocation2 + $0x200] sm:$0xf]
    %v173 = vld [vmem:[#allocation2 + $0x204] sm:$0xf]
    %v174 = vld [vmem:[#allocation2 + $0x208] sm:$0xf]
    %v175 = vld [vmem:[#allocation2 + $0x20c] sm:$0xf]
    %v176 = vld [vmem:[#allocation2 + $0x210] sm:$0xf]
    %v177 = vld [vmem:[#allocation2 + $0x214] sm:$0xf]
    %v178 = vld [vmem:[#allocation2 + $0x218] sm:$0xf]
    %v179 = vld [vmem:[#allocation2 + $0x21c] sm:$0xf]
    %v180 = vld [vmem:[#allocation2 + $0x220] sm:$0xf]
    %v181 = vld [vmem:[#allocation2 + $0x224] sm:$0xf]
    %v182 = vld [vmem:[#allocation2 + $0x228] sm:$0xf]
    %v183 = vld [vmem:[#allocation2 + $0x22c] sm:$0xf]
    %v184 = vld [vmem:[#allocation2 + $0x230] sm:$0xf]
    %v185 = vld [vmem:[#allocation2 + $0x234] sm:$0xf]
    %v186 = vld [vmem:[#allocation2 + $0x238] sm:$0xf]
    %v187 = vld [vmem:[#allocation2 + $0x23c] sm:$0xf]
    %v188 = vld [vmem:[#allocation2 + $0x240] sm:$0xf]
    %v189 = vld [vmem:[#allocation2 + $0x244] sm:$0xf]
    %v190 = vld [vmem:[#allocation2 + $0x248] sm:$0xf]
    %v191 = vld [vmem:[#allocation2 + $0x24c] sm:$0xf]
    %v192 = vld [vmem:[#allocation2 + $0x250] sm:$0xf]
    %v193 = vld [vmem:[#allocation2 + $0x254] sm:$0xf]
    %v194 = vld [vmem:[#allocation2 + $0x258] sm:$0xf]
    %v195 = vld [vmem:[#allocation2 + $0x25c] sm:$0xf]
    %v196 = vld [vmem:[#allocation2 + $0x260] sm:$0xf]
    %v197 = vld [vmem:[#allocation2 + $0x264] sm:$0xf]
    %v198 = vld [vmem:[#allocation2 + $0x268] sm:$0xf]
    %v199 = vld [vmem:[#allocation2 + $0x26c] sm:$0xf]
    %v200 = vld [vmem:[#allocation2 + $0x270] sm:$0xf]
    %v201 = vld [vmem:[#allocation2 + $0x274] sm:$0xf]
    %v202 = vld [vmem:[#allocation2 + $0x278] sm:$0xf]
    %v203 = vld [vmem:[#allocation2 + $0x27c] sm:$0xf]
    %v204 = vld [vmem:[#allocation2 + $0x280] sm:$0xf]
    %v205 = vld [vmem:[#allocation2 + $0x284] sm:$0xf]
    %v206 = vld [vmem:[#allocation2 + $0x288] sm:$0xf]
    %v207 = vld [vmem:[#allocation2 + $0x28c] sm:$0xf]
    %v208 = vld [vmem:[#allocation2 + $0x290] sm:$0xf]
    %v209 = vld [vmem:[#allocation2 + $0x294] sm:$0xf]
    %v210 = vld [vmem:[#allocation2 + $0x298] sm:$0xf]
    %v211 = vld [vmem:[#allocation2 + $0x29c] sm:$0xf]
    %v212 = vld [vmem:[#allocation2 + $0x2a0] sm:$0xf]
    %v213 = vld [vmem:[#allocation2 + $0x2a4] sm:$0xf]
    %v214 = vld [vmem:[#allocation2 + $0x2a8] sm:$0xf]
    %v215 = vld [vmem:[#allocation2 + $0x2ac] sm:$0xf]
    %v216 = vld [vmem:[#allocation2 + $0x2b0] sm:$0xf]
    %v217 = vld [vmem:[#allocation2 + $0x2b4] sm:$0xf]
    %v218 = vld [vmem:[#allocation2 + $0x2b8] sm:$0xf]
    %v219 = vld [vmem:[#allocation2 + $0x2bc] sm:$0xf]
    %v220 = vld [vmem:[#allocation2 + $0x2c0] sm:$0xf]
    %v221 = vld [vmem:[#allocation2 + $0x2c4] sm:$0xf]
    %v222 = vld [vmem:[#allocation2 + $0x2c8] sm:$0xf]
    %v223 = vld [vmem:[#allocation2 + $0x2cc] sm:$0xf]
    %v224 = vld [vmem:[#allocation2 + $0x2d0] sm:$0xf]
    %v225 = vld [vmem:[#allocation2 + $0x2d4] sm:$0xf]
    %v226 = vld [vmem:[#allocation2 + $0x2d8] sm:$0xf]
    %v227 = vld [vmem:[#allocation2 + $0x2dc] sm:$0xf]
    %v228 = vld [vmem:[#allocation2 + $0x2e0] sm:$0xf]
    %v229 = vld [vmem:[#allocation2 + $0x2e4] sm:$0xf]
    %v230 = vld [vmem:[#allocation2 + $0x2e8] sm:$0xf]
    %v231 = vld [vmem:[#allocation2 + $0x2ec] sm:$0xf]
    %v232 = vld [vmem:[#allocation2 + $0x2f0] sm:$0xf]
    %v233 = vld [vmem:[#allocation2 + $0x2f4] sm:$0xf]
    %v234 = vld [vmem:[#allocation2 + $0x2f8] sm:$0xf]
    %v235 = vld [vmem:[#allocation2 + $0x2fc] sm:$0xf]
    %v236 = vld [vmem:[#allocation2 + $0x300] sm:$0xf]
    %v237 = vld [vmem:[#allocation2 + $0x304] sm:$0xf]
    %v238 = vld [vmem:[#allocation2 + $0x308] sm:$0xf]
    %v239 = vld [vmem:[#allocation2 + $0x30c] sm:$0xf]
    %v240 = vld [vmem:[#allocation5] sm:$0xf]
    %v241 = vld [vmem:[#allocation5 + $0x4] sm:$0xf]
    %v242 = vld [vmem:[#allocation5 + $0x8] sm:$0xf]
    %v243 = vld [vmem:[#allocation5 + $0xc] sm:$0xf]
    %v244 = vld [vmem:[#allocation5 + $0x10] sm:$0xf]
    %v245 = vld [vmem:[#allocation5 + $0x14] sm:$0xf]
    %v246 = vld [vmem:[#allocation5 + $0x18] sm:$0xf]
    %v247 = vld [vmem:[#allocation5 + $0x1c] sm:$0xf]
    %v248 = vld [vmem:[#allocation5 + $0x20] sm:$0xf]
    %v249 = vld [vmem:[#allocation5 + $0x24] sm:$0xf]
    %v250 = vld [vmem:[#allocation5 + $0x28] sm:$0xf]
    %v251 = vld [vmem:[#allocation5 + $0x2c] sm:$0xf]
    %v252 = vld [vmem:[#allocation5 + $0x30] sm:$0xf]
    %v253 = vld [vmem:[#allocation5 + $0x34] sm:$0xf]
    %v254 = vld [vmem:[#allocation5 + $0x38] sm:$0xf]
    %v255 = vld [vmem:[#allocation5 + $0x3c] sm:$0xf]
    %v256 = vld [vmem:[%s2] sm:$0x1]
    %v258 = vlaneseq
    %v259 = vshrl.u32 %v258, 7
    %v260 = vsub.s32 0, %v259
    %v261 = vrot.slane %v256, %v260
    %v459 = vunpack.c.l.b16 %v44
    %v460 = vunpack.c.l.b16 %v45
    %v461 = vunpack.c.l.b16 %v46
    %v462 = vunpack.c.l.b16 %v47
    %v463 = vunpack.c.l.b16 %v48
    %v464 = vunpack.c.l.b16 %v49
    %v465 = vunpack.c.l.b16 %v50
    %v466 = vunpack.c.l.b16 %v51
    %v467 = vunpack.c.l.b16 %v52
    %v468 = vunpack.c.l.b16 %v53
    %v469 = vunpack.c.l.b16 %v54
    %v470 = vunpack.c.l.b16 %v55
    %v471 = vunpack.c.l.b16 %v56
    %v472 = vunpack.c.l.b16 %v57
    %v473 = vunpack.c.l.b16 %v58
    %v474 = vunpack.c.l.b16 %v59
    %v475 = vunpack.c.l.b16 %v60
    %v476 = vunpack.c.l.b16 %v61
    %v477 = vunpack.c.l.b16 %v62
    %v478 = vunpack.c.l.b16 %v63
    %v479 = vunpack.c.l.b16 %v64
    %v480 = vunpack.c.l.b16 %v65
    %v481 = vunpack.c.l.b16 %v66
    %v482 = vunpack.c.l.b16 %v67
    %v483 = vunpack.c.l.b16 %v68
    %v484 = vunpack.c.l.b16 %v69
    %v485 = vunpack.c.l.b16 %v70
    %v486 = vunpack.c.l.b16 %v71
    %v487 = vunpack.c.l.b16 %v72
    %v488 = vunpack.c.l.b16 %v73
    %v489 = vunpack.c.l.b16 %v74
    %v490 = vunpack.c.l.b16 %v75
    %v491 = vunpack.c.l.b16 %v76
    %v492 = vunpack.c.l.b16 %v77
    %v493 = vunpack.c.l.b16 %v78
    %v494 = vunpack.c.l.b16 %v79
    %v495 = vunpack.c.l.b16 %v80
    %v496 = vunpack.c.l.b16 %v81
    %v497 = vunpack.c.l.b16 %v82
    %v498 = vunpack.c.l.b16 %v83
    %v499 = vunpack.c.l.b16 %v84
    %v500 = vunpack.c.l.b16 %v85
    %v501 = vunpack.c.l.b16 %v86
    %v502 = vunpack.c.l.b16 %v87
    %v503 = vunpack.c.l.b16 %v88
    %v504 = vunpack.c.l.b16 %v89
    %v505 = vunpack.c.l.b16 %v90
    %v506 = vunpack.c.l.b16 %v91
    %v507 = vunpack.c.l.b16 %v92
    %v508 = vunpack.c.l.b16 %v93
    %v509 = vunpack.c.l.b16 %v94
    %v510 = vunpack.c.l.b16 %v95
    %v511 = vunpack.c.l.b16 %v96
    %v512 = vunpack.c.l.b16 %v97
    %v513 = vunpack.c.l.b16 %v98
    %v514 = vunpack.c.l.b16 %v99
    %v515 = vunpack.c.l.b16 %v100
    %v516 = vunpack.c.l.b16 %v101
    %v517 = vunpack.c.l.b16 %v102
    %v518 = vunpack.c.l.b16 %v103
    %v519 = vunpack.c.l.b16 %v104
    %v520 = vunpack.c.l.b16 %v105
    %v521 = vunpack.c.l.b16 %v106
    %v522 = vunpack.c.l.b16 %v107
    %v523 = vunpack.c.l.b16 %v108
    %v524 = vunpack.c.l.b16 %v109
    %v525 = vunpack.c.l.b16 %v110
    %v526 = vunpack.c.l.b16 %v111
    %v527 = vunpack.c.l.b16 %v112
    %v528 = vunpack.c.l.b16 %v113
    %v529 = vunpack.c.l.b16 %v114
    %v530 = vunpack.c.l.b16 %v115
    %v531 = vunpack.c.l.b16 %v116
    %v532 = vunpack.c.l.b16 %v117
    %v533 = vunpack.c.l.b16 %v118
    %v534 = vunpack.c.l.b16 %v119
    %v535 = vunpack.c.l.b16 %v120
    %v536 = vunpack.c.l.b16 %v121
    %v537 = vunpack.c.l.b16 %v122
    %v538 = vunpack.c.l.b16 %v123
    %v539 = vunpack.c.l.b16 %v124
    %v540 = vunpack.c.l.b16 %v125
    %v541 = vunpack.c.l.b16 %v126
    %v542 = vunpack.c.l.b16 %v127
    %v543 = vunpack.c.l.b16 %v128
    %v544 = vunpack.c.l.b16 %v129
    %v545 = vunpack.c.l.b16 %v130
    %v546 = vunpack.c.l.b16 %v131
    %v547 = vunpack.c.l.b16 %v132
    %v548 = vunpack.c.l.b16 %v133
    %v549 = vunpack.c.l.b16 %v134
    %v550 = vunpack.c.l.b16 %v135
    %v551 = vunpack.c.l.b16 %v136
    %v552 = vunpack.c.l.b16 %v137
    %v553 = vunpack.c.l.b16 %v138
    %v554 = vunpack.c.l.b16 %v139
    %v555 = vunpack.c.l.b16 %v140
    %v556 = vunpack.c.l.b16 %v141
    %v557 = vunpack.c.l.b16 %v142
    %v558 = vunpack.c.l.b16 %v143
    %v559 = vunpack.c.l.b16 %v144
    %v560 = vunpack.c.l.b16 %v145
    %v561 = vunpack.c.l.b16 %v146
    %v562 = vunpack.c.l.b16 %v147
    %v563 = vunpack.c.l.b16 %v148
    %v564 = vunpack.c.l.b16 %v149
    %v565 = vunpack.c.l.b16 %v150
    %v566 = vunpack.c.l.b16 %v151
    %v567 = vunpack.c.l.b16 %v152
    %v568 = vunpack.c.l.b16 %v153
    %v569 = vunpack.c.l.b16 %v154
    %v570 = vunpack.c.l.b16 %v155
    %v571 = vunpack.c.l.b16 %v156
    %v572 = vunpack.c.l.b16 %v157
    %v573 = vunpack.c.l.b16 %v158
    %v574 = vunpack.c.l.b16 %v159
    %v575 = vunpack.c.l.b16 %v160
    %v576 = vunpack.c.l.b16 %v161
    %v577 = vunpack.c.l.b16 %v162
    %v578 = vunpack.c.l.b16 %v163
    %v579 = vunpack.c.l.b16 %v164
    %v580 = vunpack.c.l.b16 %v165
    %v581 = vunpack.c.l.b16 %v166
    %v582 = vunpack.c.l.b16 %v167
    %v583 = vunpack.c.l.b16 %v168
    %v584 = vunpack.c.l.b16 %v169
    %v585 = vunpack.c.l.b16 %v170
    %v586 = vunpack.c.l.b16 %v171
    %v587 = vunpack.c.l.b16 %v172
    %v588 = vunpack.c.l.b16 %v173
    %v589 = vunpack.c.l.b16 %v174
    %v590 = vunpack.c.l.b16 %v175
    %v591 = vunpack.c.l.b16 %v176
    %v592 = vunpack.c.l.b16 %v177
    %v593 = vunpack.c.l.b16 %v178
    %v594 = vunpack.c.l.b16 %v179
    %v595 = vunpack.c.l.b16 %v180
    %v596 = vunpack.c.l.b16 %v181
    %v597 = vunpack.c.l.b16 %v182
    %v598 = vunpack.c.l.b16 %v183
    %v599 = vunpack.c.l.b16 %v184
    %v600 = vunpack.c.l.b16 %v185
    %v601 = vunpack.c.l.b16 %v186
    %v602 = vunpack.c.l.b16 %v187
    %v603 = vunpack.c.l.b16 %v188
    %v604 = vunpack.c.l.b16 %v189
    %v605 = vunpack.c.l.b16 %v190
    %v606 = vunpack.c.l.b16 %v191
    %v607 = vunpack.c.l.b16 %v192
    %v608 = vunpack.c.l.b16 %v193
    %v609 = vunpack.c.l.b16 %v194
    %v610 = vunpack.c.l.b16 %v195
    %v611 = vunpack.c.l.b16 %v196
    %v612 = vunpack.c.l.b16 %v197
    %v613 = vunpack.c.l.b16 %v198
    %v614 = vunpack.c.l.b16 %v199
    %v615 = vunpack.c.l.b16 %v200
    %v616 = vunpack.c.l.b16 %v201
    %v617 = vunpack.c.l.b16 %v202
    %v618 = vunpack.c.l.b16 %v203
    %v619 = vunpack.c.l.b16 %v204
    %v620 = vunpack.c.l.b16 %v205
    %v621 = vunpack.c.l.b16 %v206
    %v622 = vunpack.c.l.b16 %v207
    %v623 = vunpack.c.l.b16 %v208
    %v624 = vunpack.c.l.b16 %v209
    %v625 = vunpack.c.l.b16 %v210
    %v626 = vunpack.c.l.b16 %v211
    %v627 = vunpack.c.l.b16 %v212
    %v628 = vunpack.c.l.b16 %v213
    %v629 = vunpack.c.l.b16 %v214
    %v630 = vunpack.c.l.b16 %v215
    %v631 = vunpack.c.l.b16 %v216
    %v632 = vunpack.c.l.b16 %v217
    %v633 = vunpack.c.l.b16 %v218
    %v634 = vunpack.c.l.b16 %v219
    %v635 = vunpack.c.l.b16 %v220
    %v636 = vunpack.c.l.b16 %v221
    %v637 = vunpack.c.l.b16 %v222
    %v638 = vunpack.c.l.b16 %v223
    %v639 = vunpack.c.l.b16 %v224
    %v640 = vunpack.c.l.b16 %v225
    %v641 = vunpack.c.l.b16 %v226
    %v642 = vunpack.c.l.b16 %v227
    %v643 = vunpack.c.l.b16 %v228
    %v644 = vunpack.c.l.b16 %v229
    %v645 = vunpack.c.l.b16 %v230
    %v646 = vunpack.c.l.b16 %v231
    %v647 = vunpack.c.l.b16 %v232
    %v648 = vunpack.c.l.b16 %v233
    %v649 = vunpack.c.l.b16 %v234
    %v650 = vunpack.c.l.b16 %v235
    %v651 = vunpack.c.l.b16 %v236
    %v652 = vunpack.c.l.b16 %v237
    %v653 = vunpack.c.l.b16 %v238
    %v654 = vunpack.c.l.b16 %v239
    %v655 = vpack.c.b16 %v460, %v459
    %v656 = vpack.c.b16 %v462, %v461
    %v657 = vpack.c.b16 %v464, %v463
    %v658 = vpack.c.b16 %v466, %v465
    %v659 = vpack.c.b16 %v468, %v467
    %v660 = vpack.c.b16 %v470, %v469
    %v661 = vpack.c.b16 %v472, %v471
    %v662 = vpack.c.b16 %v474, %v473
    %v663 = vpack.c.b16 %v476, %v475
    %v664 = vpack.c.b16 %v478, %v477
    %v665 = vpack.c.b16 %v480, %v479
    %v666 = vpack.c.b16 %v482, %v481
    %v667 = vpack.c.b16 %v484, %v483
    %v668 = vpack.c.b16 %v486, %v485
    %v669 = vpack.c.b16 %v488, %v487
    %v670 = vpack.c.b16 %v490, %v489
    %v671 = vpack.c.b16 %v492, %v491
    %v672 = vpack.c.b16 %v494, %v493
    %v673 = vpack.c.b16 %v496, %v495
    %v674 = vpack.c.b16 %v498, %v497
    %v675 = vpack.c.b16 %v500, %v499
    %v676 = vpack.c.b16 %v502, %v501
    %v677 = vpack.c.b16 %v504, %v503
    %v678 = vpack.c.b16 %v506, %v505
    %v679 = vpack.c.b16 %v508, %v507
    %v680 = vpack.c.b16 %v510, %v509
    %v681 = vpack.c.b16 %v512, %v511
    %v682 = vpack.c.b16 %v514, %v513
    %v683 = vpack.c.b16 %v516, %v515
    %v684 = vpack.c.b16 %v518, %v517
    %v685 = vpack.c.b16 %v520, %v519
    %v686 = vpack.c.b16 %v522, %v521
    %v687 = vpack.c.b16 %v524, %v523
    %v688 = vpack.c.b16 %v526, %v525
    %v689 = vpack.c.b16 %v528, %v527
    %v690 = vpack.c.b16 %v530, %v529
    %v691 = vpack.c.b16 %v532, %v531
    %v692 = vpack.c.b16 %v534, %v533
    %v693 = vpack.c.b16 %v536, %v535
    %v694 = vpack.c.b16 %v538, %v537
    %v695 = vpack.c.b16 %v540, %v539
    %v696 = vpack.c.b16 %v542, %v541
    %v697 = vpack.c.b16 %v544, %v543
    %v698 = vpack.c.b16 %v546, %v545
    %v699 = vpack.c.b16 %v548, %v547
    %v700 = vpack.c.b16 %v550, %v549
    %v701 = vpack.c.b16 %v552, %v551
    %v702 = vpack.c.b16 %v554, %v553
    %v703 = vpack.c.b16 %v556, %v555
    %v704 = vpack.c.b16 %v558, %v557
    %v705 = vpack.c.b16 %v560, %v559
    %v706 = vpack.c.b16 %v562, %v561
    %v707 = vpack.c.b16 %v564, %v563
    %v708 = vpack.c.b16 %v566, %v565
    %v709 = vpack.c.b16 %v568, %v567
    %v710 = vpack.c.b16 %v570, %v569
    %v711 = vpack.c.b16 %v572, %v571
    %v712 = vpack.c.b16 %v574, %v573
    %v713 = vpack.c.b16 %v576, %v575
    %v714 = vpack.c.b16 %v578, %v577
    %v715 = vpack.c.b16 %v580, %v579
    %v716 = vpack.c.b16 %v582, %v581
    %v717 = vpack.c.b16 %v584, %v583
    %v718 = vpack.c.b16 %v586, %v585
    %v719 = vpack.c.b16 %v588, %v587
    %v720 = vpack.c.b16 %v590, %v589
    %v721 = vpack.c.b16 %v592, %v591
    %v722 = vpack.c.b16 %v594, %v593
    %v723 = vpack.c.b16 %v596, %v595
    %v724 = vpack.c.b16 %v598, %v597
    %v725 = vpack.c.b16 %v600, %v599
    %v726 = vpack.c.b16 %v602, %v601
    %v727 = vpack.c.b16 %v604, %v603
    %v728 = vpack.c.b16 %v606, %v605
    %v729 = vpack.c.b16 %v608, %v607
    %v730 = vpack.c.b16 %v610, %v609
    %v731 = vpack.c.b16 %v612, %v611
    %v732 = vpack.c.b16 %v614, %v613
    %v733 = vpack.c.b16 %v616, %v615
    %v734 = vpack.c.b16 %v618, %v617
    %v735 = vpack.c.b16 %v620, %v619
    %v736 = vpack.c.b16 %v622, %v621
    %v737 = vpack.c.b16 %v624, %v623
    %v738 = vpack.c.b16 %v626, %v625
    %v739 = vpack.c.b16 %v628, %v627
    %v740 = vpack.c.b16 %v630, %v629
    %v741 = vpack.c.b16 %v632, %v631
    %v742 = vpack.c.b16 %v634, %v633
    %v743 = vpack.c.b16 %v636, %v635
    %v744 = vpack.c.b16 %v638, %v637
    %v745 = vpack.c.b16 %v640, %v639
    %v746 = vpack.c.b16 %v642, %v641
    %v747 = vpack.c.b16 %v644, %v643
    %v748 = vpack.c.b16 %v646, %v645
    %v749 = vpack.c.b16 %v648, %v647
    %v750 = vpack.c.b16 %v650, %v649
    %v751 = vpack.c.b16 %v652, %v651
    %v752 = vpack.c.b16 %v654, %v653
    %v867 = vunpack.c.l.b16 %v240
    %v868 = vunpack.c.l.b16 %v241
    %v869 = vunpack.c.l.b16 %v242
    %v870 = vunpack.c.l.b16 %v243
    %v871 = vunpack.c.l.b16 %v244
    %v872 = vunpack.c.l.b16 %v245
    %v873 = vunpack.c.l.b16 %v246
    %v874 = vunpack.c.l.b16 %v247
    %v875 = vunpack.c.l.b16 %v248
    %v876 = vunpack.c.l.b16 %v249
    %v877 = vunpack.c.l.b16 %v250
    %v878 = vunpack.c.l.b16 %v251
    %v879 = vunpack.c.l.b16 %v252
    %v880 = vunpack.c.l.b16 %v253
    %v881 = vunpack.c.l.b16 %v254
    %v882 = vunpack.c.l.b16 %v255
    %v883 = vpack.c.b16 %v868, %v867
    %v884 = vpack.c.b16 %v870, %v869
    %v885 = vpack.c.b16 %v872, %v871
    %v886 = vpack.c.b16 %v874, %v873
    %v887 = vpack.c.b16 %v876, %v875
    %v888 = vpack.c.b16 %v878, %v877
    %v889 = vpack.c.b16 %v880, %v879
    %v890 = vpack.c.b16 %v882, %v881
    %899 = vmatprep.subr.bf16.mxu0 0
    %900 = vmatpush1.bf16.msra.mxu0 %v883
    %901 = vmatprep.subr.bf16.mxu0 0
    %902 = vmatpush1.bf16.msra.mxu0 %v884
    %903 = vmatprep.subr.bf16.mxu0 0
    %904 = vmatpush1.bf16.msra.mxu0 %v885
    %905 = vmatprep.subr.bf16.mxu0 0
    %906 = vmatpush1.bf16.msra.mxu0 %v886
    %907 = vmatprep.subr.bf16.mxu0 0
    %908 = vmatpush1.bf16.msra.mxu0 %v887
    %909 = vmatprep.subr.bf16.mxu0 0
    %910 = vmatpush1.bf16.msra.mxu0 %v888
    %911 = vmatprep.subr.bf16.mxu0 0
    %912 = vmatpush1.bf16.msra.mxu0 %v889
    %913 = vmatprep.subr.bf16.mxu0 0
    %914 = vmatpush1.bf16.msra.mxu0 %v890
    %915 = vmatprep.subr.bf16.mxu0 0
    %916 = vmatpush1.bf16.msra.mxu0 0
    %917 = vmatprep.subr.bf16.mxu0 0
    %918 = vmatpush1.bf16.msra.mxu0 0
    %919 = vmatprep.subr.bf16.mxu0 0
    %920 = vmatpush1.bf16.msra.mxu0 0
    %921 = vmatprep.subr.bf16.mxu0 0
    %922 = vmatpush1.bf16.msra.mxu0 0
    %923 = vmatprep.subr.bf16.mxu0 0
    %924 = vmatpush1.bf16.msra.mxu0 0
    %925 = vmatprep.subr.bf16.mxu0 0
    %926 = vmatpush1.bf16.msra.mxu0 0
    %927 = vmatprep.subr.bf16.mxu0 0
    %928 = vmatpush1.bf16.msra.mxu0 0
    %929 = vmatprep.subr.bf16.mxu0 0
    %930 = vmatpush1.bf16.msra.mxu0 0
    %931 = vmatprep.mubr.bf16.mxu0 0
    %932 = vmatmul.mubr.bf16.gmra.mrb[0].mxu0 %v655
    %v933 = vpop.f32.mrb[0].mxu0
    %v934 = vadd.f32 %v261, %v933
    %v935 = vpop.f32.mrb[0].mxu0
    %v936 = vpop.f32.mrb[0].mxu0
    %v937 = vadd.f32 %v261, %v936
    %v938 = vpop.f32.mrb[0].mxu0
    %939 = vmatprep.mubr.bf16.mxu0 0
    %940 = vmatmul.mubr.bf16.gmra.mrb[0].mxu0 %v656
    %v941 = vpop.f32.mrb[0].mxu0
    %v942 = vadd.f32 %v261, %v941
    %v943 = vpop.f32.mrb[0].mxu0
    %v944 = vpop.f32.mrb[0].mxu0
    %v945 = vadd.f32 %v261, %v944
    %v946 = vpop.f32.mrb[0].mxu0
    %947 = vmatprep.mubr.bf16.mxu0 0
    %948 = vmatmul.mubr.bf16.gmra.mrb[0].mxu0 %v657
    %v949 = vpop.f32.mrb[0].mxu0
    %v950 = vadd.f32 %v261, %v949
    %v951 = vpop.f32.mrb[0].mxu0
    %v952 = vpop.f32.mrb[0].mxu0
    %v953 = vadd.f32 %v261, %v952
    %v954 = vpop.f32.mrb[0].mxu0
    %955 = vmatprep.mubr.bf16.mxu0 0
    %956 = vmatmul.mubr.bf16.gmra.mrb[0].mxu0 %v658
    %v957 = vpop.f32.mrb[0].mxu0
    %v958 = vadd.f32 %v261, %v957
    %v959 = vpop.f32.mrb[0].mxu0
    %v960 = vpop.f32.mrb[0].mxu0
    %v961 = vadd.f32 %v261, %v960
    %v962 = vpop.f32.mrb[0].mxu0
    %963 = vmatprep.mubr.bf16.mxu0 0
    %964 = vmatmul.mubr.bf16.gmra.mrb[0].mxu0 %v659
    %v965 = vpop.f32.mrb[0].mxu0
    %v966 = vadd.f32 %v261, %v965
    %v967 = vpop.f32.mrb[0].mxu0
    %v968 = vpop.f32.mrb[0].mxu0
    %v969 = vadd.f32 %v261, %v968
    %v970 = vpop.f32.mrb[0].mxu0
    %971 = vmatprep.mubr.bf16.mxu0 0
    %972 = vmatmul.mubr.bf16.gmra.mrb[0].mxu0 %v660
    %v973 = vpop.f32.mrb[0].mxu0
    %v974 = vadd.f32 %v261, %v973
    %v975 = vpop.f32.mrb[0].mxu0
    %v976 = vpop.f32.mrb[0].mxu0
    %v977 = vadd.f32 %v261, %v976
    %v978 = vpop.f32.mrb[0].mxu0
    %979 = vmatprep.mubr.bf16.mxu0 0
    %980 = vmatmul.mubr.bf16.gmra.mrb[0].mxu0 %v661
    %v981 = vpop.f32.mrb[0].mxu0
    %v982 = vadd.f32 %v261, %v981
    %v983 = vpop.f32.mrb[0].mxu0
    %v984 = vpop.f32.mrb[0].mxu0
    %v985 = vadd.f32 %v261, %v984
    %v986 = vpop.f32.mrb[0].mxu0
    %987 = vmatprep.mubr.bf16.mxu0 0
    %988 = vmatmul.mubr.bf16.gmra.mrb[0].mxu0 %v662
    %v989 = vpop.f32.mrb[0].mxu0
    %v990 = vadd.f32 %v261, %v989
    %v991 = vpop.f32.mrb[0].mxu0
    %v992 = vpop.f32.mrb[0].mxu0
    %v993 = vadd.f32 %v261, %v992
    %v994 = vpop.f32.mrb[0].mxu0
    %995 = vmatprep.mubr.bf16.mxu0 0
    %996 = vmatmul.mubr.bf16.gmra.mrb[0].mxu0 %v663
    %v997 = vpop.f32.mrb[0].mxu0
    %v998 = vadd.f32 %v261, %v997
    %v999 = vpop.f32.mrb[0].mxu0
    %v1000 = vpop.f32.mrb[0].mxu0
    %v1001 = vadd.f32 %v261, %v1000
    %v1002 = vpop.f32.mrb[0].mxu0
    %1003 = vmatprep.mubr.bf16.mxu0 0
    %1004 = vmatmul.mubr.bf16.gmra.mrb[0].mxu0 %v664
    %v1005 = vpop.f32.mrb[0].mxu0
    %v1006 = vadd.f32 %v261, %v1005
    %v1007 = vpop.f32.mrb[0].mxu0
    %v1008 = vpop.f32.mrb[0].mxu0
    %v1009 = vadd.f32 %v261, %v1008
    %v1010 = vpop.f32.mrb[0].mxu0
    %1011 = vmatprep.mubr.bf16.mxu0 0
    %1012 = vmatmul.mubr.bf16.gmra.mrb[0].mxu0 %v665
    %v1013 = vpop.f32.mrb[0].mxu0
    %v1014 = vadd.f32 %v261, %v1013
    %v1015 = vpop.f32.mrb[0].mxu0
    %v1016 = vpop.f32.mrb[0].mxu0
    %v1017 = vadd.f32 %v261, %v1016
    %v1018 = vpop.f32.mrb[0].mxu0
    %1019 = vmatprep.mubr.bf16.mxu0 0
    %1020 = vmatmul.mubr.bf16.gmra.mrb[0].mxu0 %v666
    %v1021 = vpop.f32.mrb[0].mxu0
    %v1022 = vadd.f32 %v261, %v1021
    %v1023 = vpop.f32.mrb[0].mxu0
    %v1024 = vpop.f32.mrb[0].mxu0
    %v1025 = vadd.f32 %v261, %v1024
    %v1026 = vpop.f32.mrb[0].mxu0
    %1027 = vmatprep.mubr.bf16.mxu0 0
    %1028 = vmatmul.mubr.bf16.gmra.mrb[0].mxu0 %v667
    %v1029 = vpop.f32.mrb[0].mxu0
    %v1030 = vadd.f32 %v261, %v1029
    %v1031 = vpop.f32.mrb[0].mxu0
    %v1032 = vpop.f32.mrb[0].mxu0
    %v1033 = vadd.f32 %v261, %v1032
    %v1034 = vpop.f32.mrb[0].mxu0
    %1035 = vmatprep.mubr.bf16.mxu0 0
    %1036 = vmatmul.mubr.bf16.gmra.mrb[0].mxu0 %v668
    %v1037 = vpop.f32.mrb[0].mxu0
    %v1038 = vadd.f32 %v261, %v1037
    %v1039 = vpop.f32.mrb[0].mxu0
    %v1040 = vpop.f32.mrb[0].mxu0
    %v1041 = vadd.f32 %v261, %v1040
    %v1042 = vpop.f32.mrb[0].mxu0
    %1043 = vmatprep.mubr.bf16.mxu0 0
    %1044 = vmatmul.mubr.bf16.gmra.mrb[0].mxu0 %v669
    %v1045 = vpop.f32.mrb[0].mxu0
    %v1046 = vadd.f32 %v261, %v1045
    %v1047 = vpop.f32.mrb[0].mxu0
    %v1048 = vpop.f32.mrb[0].mxu0
    %v1049 = vadd.f32 %v261, %v1048
    %v1050 = vpop.f32.mrb[0].mxu0
    %1051 = vmatprep.mubr.bf16.mxu0 0
    %1052 = vmatmul.mubr.bf16.gmra.mrb[0].mxu0 %v670
    %v1053 = vpop.f32.mrb[0].mxu0
    %v1054 = vadd.f32 %v261, %v1053
    %v1055 = vpop.f32.mrb[0].mxu0
    %v1056 = vpop.f32.mrb[0].mxu0
    %v1057 = vadd.f32 %v261, %v1056
    %v1058 = vpop.f32.mrb[0].mxu0
    %1059 = vmatprep.mubr.bf16.mxu0 0
    %1060 = vmatmul.mubr.bf16.gmra.mrb[0].mxu0 %v671
    %v1061 = vpop.f32.mrb[0].mxu0
    %v1062 = vadd.f32 %v261, %v1061
    %v1063 = vpop.f32.mrb[0].mxu0
    %v1064 = vpop.f32.mrb[0].mxu0
    %v1065 = vadd.f32 %v261, %v1064
    %v1066 = vpop.f32.mrb[0].mxu0
    %1067 = vmatprep.mubr.bf16.mxu0 0
    %1068 = vmatmul.mubr.bf16.gmra.mrb[0].mxu0 %v672
    %v1069 = vpop.f32.mrb[0].mxu0
    %v1070 = vadd.f32 %v261, %v1069
    %v1071 = vpop.f32.mrb[0].mxu0
    %v1072 = vpop.f32.mrb[0].mxu0
    %v1073 = vadd.f32 %v261, %v1072
    %v1074 = vpop.f32.mrb[0].mxu0
    %1075 = vmatprep.mubr.bf16.mxu0 0
    %1076 = vmatmul.mubr.bf16.gmra.mrb[0].mxu0 %v673
    %v1077 = vpop.f32.mrb[0].mxu0
    %v1078 = vadd.f32 %v261, %v1077
    %v1079 = vpop.f32.mrb[0].mxu0
    %v1080 = vpop.f32.mrb[0].mxu0
    %v1081 = vadd.f32 %v261, %v1080
    %v1082 = vpop.f32.mrb[0].mxu0
    %1083 = vmatprep.mubr.bf16.mxu0 0
    %1084 = vmatmul.mubr.bf16.gmra.mrb[0].mxu0 %v674
    %v1085 = vpop.f32.mrb[0].mxu0
    %v1086 = vadd.f32 %v261, %v1085
    %v1087 = vpop.f32.mrb[0].mxu0
    %v1088 = vpop.f32.mrb[0].mxu0
    %v1089 = vadd.f32 %v261, %v1088
    %v1090 = vpop.f32.mrb[0].mxu0
    %1091 = vmatprep.mubr.bf16.mxu0 0
    %1092 = vmatmul.mubr.bf16.gmra.mrb[0].mxu0 %v675
    %v1093 = vpop.f32.mrb[0].mxu0
    %v1094 = vadd.f32 %v261, %v1093
    %v1095 = vpop.f32.mrb[0].mxu0
    %v1096 = vpop.f32.mrb[0].mxu0
    %v1097 = vadd.f32 %v261, %v1096
    %v1098 = vpop.f32.mrb[0].mxu0
    %1099 = vmatprep.mubr.bf16.mxu0 0
    %1100 = vmatmul.mubr.bf16.gmra.mrb[0].mxu0 %v676
    %v1101 = vpop.f32.mrb[0].mxu0
    %v1102 = vadd.f32 %v261, %v1101
    %v1103 = vpop.f32.mrb[0].mxu0
    %v1104 = vpop.f32.mrb[0].mxu0
    %v1105 = vadd.f32 %v261, %v1104
    %v1106 = vpop.f32.mrb[0].mxu0
    %1107 = vmatprep.mubr.bf16.mxu0 0
    %1108 = vmatmul.mubr.bf16.gmra.mrb[0].mxu0 %v677
    %v1109 = vpop.f32.mrb[0].mxu0
    %v1110 = vadd.f32 %v261, %v1109
    %v1111 = vpop.f32.mrb[0].mxu0
    %v1112 = vpop.f32.mrb[0].mxu0
    %v1113 = vadd.f32 %v261, %v1112
    %v1114 = vpop.f32.mrb[0].mxu0
    %1115 = vmatprep.mubr.bf16.mxu0 0
    %1116 = vmatmul.mubr.bf16.gmra.mrb[0].mxu0 %v678
    %v1117 = vpop.f32.mrb[0].mxu0
    %v1118 = vadd.f32 %v261, %v1117
    %v1119 = vpop.f32.mrb[0].mxu0
    %v1120 = vpop.f32.mrb[0].mxu0
    %v1121 = vadd.f32 %v261, %v1120
    %v1122 = vpop.f32.mrb[0].mxu0
    %1123 = vmatprep.mubr.bf16.mxu0 0
    %1124 = vmatmul.mubr.bf16.gmra.mrb[0].mxu0 %v679
    %v1125 = vpop.f32.mrb[0].mxu0
    %v1126 = vadd.f32 %v261, %v1125
    %v1127 = vpop.f32.mrb[0].mxu0
    %v1128 = vpop.f32.mrb[0].mxu0
    %v1129 = vadd.f32 %v261, %v1128
    %v1130 = vpop.f32.mrb[0].mxu0
    %1131 = vmatprep.mubr.bf16.mxu0 0
    %1132 = vmatmul.mubr.bf16.gmra.mrb[0].mxu0 %v680
    %v1133 = vpop.f32.mrb[0].mxu0
    %v1134 = vadd.f32 %v261, %v1133
    %v1135 = vpop.f32.mrb[0].mxu0
    %v1136 = vpop.f32.mrb[0].mxu0
    %v1137 = vadd.f32 %v261, %v1136
    %v1138 = vpop.f32.mrb[0].mxu0
    %1139 = vmatprep.mubr.bf16.mxu0 0
    %1140 = vmatmul.mubr.bf16.gmra.mrb[0].mxu0 %v681
    %v1141 = vpop.f32.mrb[0].mxu0
    %v1142 = vadd.f32 %v261, %v1141
    %v1143 = vpop.f32.mrb[0].mxu0
    %v1144 = vpop.f32.mrb[0].mxu0
    %v1145 = vadd.f32 %v261, %v1144
    %v1146 = vpop.f32.mrb[0].mxu0
    %1147 = vmatprep.mubr.bf16.mxu0 0
    %1148 = vmatmul.mubr.bf16.gmra.mrb[0].mxu0 %v682
    %v1149 = vpop.f32.mrb[0].mxu0
    %v1150 = vadd.f32 %v261, %v1149
    %v1151 = vpop.f32.mrb[0].mxu0
    %v1152 = vpop.f32.mrb[0].mxu0
    %v1153 = vadd.f32 %v261, %v1152
    %v1154 = vpop.f32.mrb[0].mxu0
    %1155 = vmatprep.mubr.bf16.mxu0 0
    %1156 = vmatmul.mubr.bf16.gmra.mrb[0].mxu0 %v683
    %v1157 = vpop.f32.mrb[0].mxu0
    %v1158 = vadd.f32 %v261, %v1157
    %v1159 = vpop.f32.mrb[0].mxu0
    %v1160 = vpop.f32.mrb[0].mxu0
    %v1161 = vadd.f32 %v261, %v1160
    %v1162 = vpop.f32.mrb[0].mxu0
    %1163 = vmatprep.mubr.bf16.mxu0 0
    %1164 = vmatmul.mubr.bf16.gmra.mrb[0].mxu0 %v684
    %v1165 = vpop.f32.mrb[0].mxu0
    %v1166 = vadd.f32 %v261, %v1165
    %v1167 = vpop.f32.mrb[0].mxu0
    %v1168 = vpop.f32.mrb[0].mxu0
    %v1169 = vadd.f32 %v261, %v1168
    %v1170 = vpop.f32.mrb[0].mxu0
    %1171 = vmatprep.mubr.bf16.mxu0 0
    %1172 = vmatmul.mubr.bf16.gmra.mrb[0].mxu0 %v685
    %v1173 = vpop.f32.mrb[0].mxu0
    %v1174 = vadd.f32 %v261, %v1173
    %v1175 = vpop.f32.mrb[0].mxu0
    %v1176 = vpop.f32.mrb[0].mxu0
    %v1177 = vadd.f32 %v261, %v1176
    %v1178 = vpop.f32.mrb[0].mxu0
    %1179 = vmatprep.mubr.bf16.mxu0 0
    %1180 = vmatmul.mubr.bf16.gmra.mrb[0].mxu0 %v686
    %v1181 = vpop.f32.mrb[0].mxu0
    %v1182 = vadd.f32 %v261, %v1181
    %v1183 = vpop.f32.mrb[0].mxu0
    %v1184 = vpop.f32.mrb[0].mxu0
    %v1185 = vadd.f32 %v261, %v1184
    %v1186 = vpop.f32.mrb[0].mxu0
    %1187 = vmatprep.mubr.bf16.mxu0 0
    %1188 = vmatmul.mubr.bf16.gmra.mrb[0].mxu0 %v687
    %v1189 = vpop.f32.mrb[0].mxu0
    %v1190 = vadd.f32 %v261, %v1189
    %v1191 = vpop.f32.mrb[0].mxu0
    %v1192 = vpop.f32.mrb[0].mxu0
    %v1193 = vadd.f32 %v261, %v1192
    %v1194 = vpop.f32.mrb[0].mxu0
    %1195 = vmatprep.mubr.bf16.mxu0 0
    %1196 = vmatmul.mubr.bf16.gmra.mrb[0].mxu0 %v688
    %v1197 = vpop.f32.mrb[0].mxu0
    %v1198 = vadd.f32 %v261, %v1197
    %v1199 = vpop.f32.mrb[0].mxu0
    %v1200 = vpop.f32.mrb[0].mxu0
    %v1201 = vadd.f32 %v261, %v1200
    %v1202 = vpop.f32.mrb[0].mxu0
    %1203 = vmatprep.mubr.bf16.mxu0 0
    %1204 = vmatmul.mubr.bf16.gmra.mrb[0].mxu0 %v689
    %v1205 = vpop.f32.mrb[0].mxu0
    %v1206 = vadd.f32 %v261, %v1205
    %v1207 = vpop.f32.mrb[0].mxu0
    %v1208 = vpop.f32.mrb[0].mxu0
    %v1209 = vadd.f32 %v261, %v1208
    %v1210 = vpop.f32.mrb[0].mxu0
    %1211 = vmatprep.mubr.bf16.mxu0 0
    %1212 = vmatmul.mubr.bf16.gmra.mrb[0].mxu0 %v690
    %v1213 = vpop.f32.mrb[0].mxu0
    %v1214 = vadd.f32 %v261, %v1213
    %v1215 = vpop.f32.mrb[0].mxu0
    %v1216 = vpop.f32.mrb[0].mxu0
    %v1217 = vadd.f32 %v261, %v1216
    %v1218 = vpop.f32.mrb[0].mxu0
    %1219 = vmatprep.mubr.bf16.mxu0 0
    %1220 = vmatmul.mubr.bf16.gmra.mrb[0].mxu0 %v691
    %v1221 = vpop.f32.mrb[0].mxu0
    %v1222 = vadd.f32 %v261, %v1221
    %v1223 = vpop.f32.mrb[0].mxu0
    %v1224 = vpop.f32.mrb[0].mxu0
    %v1225 = vadd.f32 %v261, %v1224
    %v1226 = vpop.f32.mrb[0].mxu0
    %1227 = vmatprep.mubr.bf16.mxu0 0
    %1228 = vmatmul.mubr.bf16.gmra.mrb[0].mxu0 %v692
    %v1229 = vpop.f32.mrb[0].mxu0
    %v1230 = vadd.f32 %v261, %v1229
    %v1231 = vpop.f32.mrb[0].mxu0
    %v1232 = vpop.f32.mrb[0].mxu0
    %v1233 = vadd.f32 %v261, %v1232
    %v1234 = vpop.f32.mrb[0].mxu0
    %1235 = vmatprep.mubr.bf16.mxu0 0
    %1236 = vmatmul.mubr.bf16.gmra.mrb[0].mxu0 %v693
    %v1237 = vpop.f32.mrb[0].mxu0
    %v1238 = vadd.f32 %v261, %v1237
    %v1239 = vpop.f32.mrb[0].mxu0
    %v1240 = vpop.f32.mrb[0].mxu0
    %v1241 = vadd.f32 %v261, %v1240
    %v1242 = vpop.f32.mrb[0].mxu0
    %1243 = vmatprep.mubr.bf16.mxu0 0
    %1244 = vmatmul.mubr.bf16.gmra.mrb[0].mxu0 %v694
    %v1245 = vpop.f32.mrb[0].mxu0
    %v1246 = vadd.f32 %v261, %v1245
    %v1247 = vpop.f32.mrb[0].mxu0
    %v1248 = vpop.f32.mrb[0].mxu0
    %v1249 = vadd.f32 %v261, %v1248
    %v1250 = vpop.f32.mrb[0].mxu0
    %1251 = vmatprep.mubr.bf16.mxu0 0
    %1252 = vmatmul.mubr.bf16.gmra.mrb[0].mxu0 %v695
    %v1253 = vpop.f32.mrb[0].mxu0
    %v1254 = vadd.f32 %v261, %v1253
    %v1255 = vpop.f32.mrb[0].mxu0
    %v1256 = vpop.f32.mrb[0].mxu0
    %v1257 = vadd.f32 %v261, %v1256
    %v1258 = vpop.f32.mrb[0].mxu0
    %1259 = vmatprep.mubr.bf16.mxu0 0
    %1260 = vmatmul.mubr.bf16.gmra.mrb[0].mxu0 %v696
    %v1261 = vpop.f32.mrb[0].mxu0
    %v1262 = vadd.f32 %v261, %v1261
    %v1263 = vpop.f32.mrb[0].mxu0
    %v1264 = vpop.f32.mrb[0].mxu0
    %v1265 = vadd.f32 %v261, %v1264
    %v1266 = vpop.f32.mrb[0].mxu0
    %1267 = vmatprep.mubr.bf16.mxu0 0
    %1268 = vmatmul.mubr.bf16.gmra.mrb[0].mxu0 %v697
    %v1269 = vpop.f32.mrb[0].mxu0
    %v1270 = vadd.f32 %v261, %v1269
    %v1271 = vpop.f32.mrb[0].mxu0
    %v1272 = vpop.f32.mrb[0].mxu0
    %v1273 = vadd.f32 %v261, %v1272
    %v1274 = vpop.f32.mrb[0].mxu0
    %1275 = vmatprep.mubr.bf16.mxu0 0
    %1276 = vmatmul.mubr.bf16.gmra.mrb[0].mxu0 %v698
    %v1277 = vpop.f32.mrb[0].mxu0
    %v1278 = vadd.f32 %v261, %v1277
    %v1279 = vpop.f32.mrb[0].mxu0
    %v1280 = vpop.f32.mrb[0].mxu0
    %v1281 = vadd.f32 %v261, %v1280
    %v1282 = vpop.f32.mrb[0].mxu0
    %1283 = vmatprep.mubr.bf16.mxu0 0
    %1284 = vmatmul.mubr.bf16.gmra.mrb[0].mxu0 %v699
    %v1285 = vpop.f32.mrb[0].mxu0
    %v1286 = vadd.f32 %v261, %v1285
    %v1287 = vpop.f32.mrb[0].mxu0
    %v1288 = vpop.f32.mrb[0].mxu0
    %v1289 = vadd.f32 %v261, %v1288
    %v1290 = vpop.f32.mrb[0].mxu0
    %1291 = vmatprep.mubr.bf16.mxu0 0
    %1292 = vmatmul.mubr.bf16.gmra.mrb[0].mxu0 %v700
    %v1293 = vpop.f32.mrb[0].mxu0
    %v1294 = vadd.f32 %v261, %v1293
    %v1295 = vpop.f32.mrb[0].mxu0
    %v1296 = vpop.f32.mrb[0].mxu0
    %v1297 = vadd.f32 %v261, %v1296
    %v1298 = vpop.f32.mrb[0].mxu0
    %1299 = vmatprep.mubr.bf16.mxu0 0
    %1300 = vmatmul.mubr.bf16.gmra.mrb[0].mxu0 %v701
    %v1301 = vpop.f32.mrb[0].mxu0
    %v1302 = vadd.f32 %v261, %v1301
    %v1303 = vpop.f32.mrb[0].mxu0
    %v1304 = vpop.f32.mrb[0].mxu0
    %v1305 = vadd.f32 %v261, %v1304
    %v1306 = vpop.f32.mrb[0].mxu0
    %1307 = vmatprep.mubr.bf16.mxu0 0
    %1308 = vmatmul.mubr.bf16.gmra.mrb[0].mxu0 %v702
    %v1309 = vpop.f32.mrb[0].mxu0
    %v1310 = vadd.f32 %v261, %v1309
    %v1311 = vpop.f32.mrb[0].mxu0
    %v1312 = vpop.f32.mrb[0].mxu0
    %v1313 = vadd.f32 %v261, %v1312
    %v1314 = vpop.f32.mrb[0].mxu0
    %1315 = vmatprep.mubr.bf16.mxu0 0
    %1316 = vmatmul.mubr.bf16.gmra.mrb[0].mxu0 %v703
    %v1317 = vpop.f32.mrb[0].mxu0
    %v1318 = vadd.f32 %v261, %v1317
    %v1319 = vpop.f32.mrb[0].mxu0
    %v1320 = vpop.f32.mrb[0].mxu0
    %v1321 = vadd.f32 %v261, %v1320
    %v1322 = vpop.f32.mrb[0].mxu0
    %1323 = vmatprep.mubr.bf16.mxu0 0
    %1324 = vmatmul.mubr.bf16.gmra.mrb[0].mxu0 %v704
    %v1325 = vpop.f32.mrb[0].mxu0
    %v1326 = vadd.f32 %v261, %v1325
    %v1327 = vpop.f32.mrb[0].mxu0
    %v1328 = vpop.f32.mrb[0].mxu0
    %v1329 = vadd.f32 %v261, %v1328
    %v1330 = vpop.f32.mrb[0].mxu0
    %1331 = vmatprep.mubr.bf16.mxu0 0
    %1332 = vmatmul.mubr.bf16.gmra.mrb[0].mxu0 %v705
    %v1333 = vpop.f32.mrb[0].mxu0
    %v1334 = vadd.f32 %v261, %v1333
    %v1335 = vpop.f32.mrb[0].mxu0
    %v1336 = vpop.f32.mrb[0].mxu0
    %v1337 = vadd.f32 %v261, %v1336
    %v1338 = vpop.f32.mrb[0].mxu0
    %1339 = vmatprep.mubr.bf16.mxu0 0
    %1340 = vmatmul.mubr.bf16.gmra.mrb[0].mxu0 %v706
    %v1341 = vpop.f32.mrb[0].mxu0
    %v1342 = vadd.f32 %v261, %v1341
    %v1343 = vpop.f32.mrb[0].mxu0
    %v1344 = vpop.f32.mrb[0].mxu0
    %v1345 = vadd.f32 %v261, %v1344
    %v1346 = vpop.f32.mrb[0].mxu0
    %1347 = vmatprep.mubr.bf16.mxu0 0
    %1348 = vmatmul.mubr.bf16.gmra.mrb[0].mxu0 %v707
    %v1349 = vpop.f32.mrb[0].mxu0
    %v1350 = vadd.f32 %v261, %v1349
    %v1351 = vpop.f32.mrb[0].mxu0
    %v1352 = vpop.f32.mrb[0].mxu0
    %v1353 = vadd.f32 %v261, %v1352
    %v1354 = vpop.f32.mrb[0].mxu0
    %1355 = vmatprep.mubr.bf16.mxu0 0
    %1356 = vmatmul.mubr.bf16.gmra.mrb[0].mxu0 %v708
    %v1357 = vpop.f32.mrb[0].mxu0
    %v1358 = vadd.f32 %v261, %v1357
    %v1359 = vpop.f32.mrb[0].mxu0
    %v1360 = vpop.f32.mrb[0].mxu0
    %v1361 = vadd.f32 %v261, %v1360
    %v1362 = vpop.f32.mrb[0].mxu0
    %1363 = vmatprep.mubr.bf16.mxu0 0
    %1364 = vmatmul.mubr.bf16.gmra.mrb[0].mxu0 %v709
    %v1365 = vpop.f32.mrb[0].mxu0
    %v1366 = vadd.f32 %v261, %v1365
    %v1367 = vpop.f32.mrb[0].mxu0
    %v1368 = vpop.f32.mrb[0].mxu0
    %v1369 = vadd.f32 %v261, %v1368
    %v1370 = vpop.f32.mrb[0].mxu0
    %1371 = vmatprep.mubr.bf16.mxu0 0
    %1372 = vmatmul.mubr.bf16.gmra.mrb[0].mxu0 %v710
    %v1373 = vpop.f32.mrb[0].mxu0
    %v1374 = vadd.f32 %v261, %v1373
    %v1375 = vpop.f32.mrb[0].mxu0
    %v1376 = vpop.f32.mrb[0].mxu0
    %v1377 = vadd.f32 %v261, %v1376
    %v1378 = vpop.f32.mrb[0].mxu0
    %1379 = vmatprep.mubr.bf16.mxu0 0
    %1380 = vmatmul.mubr.bf16.gmra.mrb[0].mxu0 %v711
    %v1381 = vpop.f32.mrb[0].mxu0
    %v1382 = vadd.f32 %v261, %v1381
    %v1383 = vpop.f32.mrb[0].mxu0
    %v1384 = vpop.f32.mrb[0].mxu0
    %v1385 = vadd.f32 %v261, %v1384
    %v1386 = vpop.f32.mrb[0].mxu0
    %1387 = vmatprep.mubr.bf16.mxu0 0
    %1388 = vmatmul.mubr.bf16.gmra.mrb[0].mxu0 %v712
    %v1389 = vpop.f32.mrb[0].mxu0
    %v1390 = vadd.f32 %v261, %v1389
    %v1391 = vpop.f32.mrb[0].mxu0
    %v1392 = vpop.f32.mrb[0].mxu0
    %v1393 = vadd.f32 %v261, %v1392
    %v1394 = vpop.f32.mrb[0].mxu0
    %1395 = vmatprep.mubr.bf16.mxu0 0
    %1396 = vmatmul.mubr.bf16.gmra.mrb[0].mxu0 %v713
    %v1397 = vpop.f32.mrb[0].mxu0
    %v1398 = vadd.f32 %v261, %v1397
    %v1399 = vpop.f32.mrb[0].mxu0
    %v1400 = vpop.f32.mrb[0].mxu0
    %v1401 = vadd.f32 %v261, %v1400
    %v1402 = vpop.f32.mrb[0].mxu0
    %1403 = vmatprep.mubr.bf16.mxu0 0
    %1404 = vmatmul.mubr.bf16.gmra.mrb[0].mxu0 %v714
    %v1405 = vpop.f32.mrb[0].mxu0
    %v1406 = vadd.f32 %v261, %v1405
    %v1407 = vpop.f32.mrb[0].mxu0
    %v1408 = vpop.f32.mrb[0].mxu0
    %v1409 = vadd.f32 %v261, %v1408
    %v1410 = vpop.f32.mrb[0].mxu0
    %1411 = vmatprep.mubr.bf16.mxu0 0
    %1412 = vmatmul.mubr.bf16.gmra.mrb[0].mxu0 %v715
    %v1413 = vpop.f32.mrb[0].mxu0
    %v1414 = vadd.f32 %v261, %v1413
    %v1415 = vpop.f32.mrb[0].mxu0
    %v1416 = vpop.f32.mrb[0].mxu0
    %v1417 = vadd.f32 %v261, %v1416
    %v1418 = vpop.f32.mrb[0].mxu0
    %1419 = vmatprep.mubr.bf16.mxu0 0
    %1420 = vmatmul.mubr.bf16.gmra.mrb[0].mxu0 %v716
    %v1421 = vpop.f32.mrb[0].mxu0
    %v1422 = vadd.f32 %v261, %v1421
    %v1423 = vpop.f32.mrb[0].mxu0
    %v1424 = vpop.f32.mrb[0].mxu0
    %v1425 = vadd.f32 %v261, %v1424
    %v1426 = vpop.f32.mrb[0].mxu0
    %1427 = vmatprep.mubr.bf16.mxu0 0
    %1428 = vmatmul.mubr.bf16.gmra.mrb[0].mxu0 %v717
    %v1429 = vpop.f32.mrb[0].mxu0
    %v1430 = vadd.f32 %v261, %v1429
    %v1431 = vpop.f32.mrb[0].mxu0
    %v1432 = vpop.f32.mrb[0].mxu0
    %v1433 = vadd.f32 %v261, %v1432
    %v1434 = vpop.f32.mrb[0].mxu0
    %1435 = vmatprep.mubr.bf16.mxu0 0
    %1436 = vmatmul.mubr.bf16.gmra.mrb[0].mxu0 %v718
    %v1437 = vpop.f32.mrb[0].mxu0
    %v1438 = vadd.f32 %v261, %v1437
    %v1439 = vpop.f32.mrb[0].mxu0
    %v1440 = vpop.f32.mrb[0].mxu0
    %v1441 = vadd.f32 %v261, %v1440
    %v1442 = vpop.f32.mrb[0].mxu0
    %1443 = vmatprep.mubr.bf16.mxu0 0
    %1444 = vmatmul.mubr.bf16.gmra.mrb[0].mxu0 %v719
    %v1445 = vpop.f32.mrb[0].mxu0
    %v1446 = vadd.f32 %v261, %v1445
    %v1447 = vpop.f32.mrb[0].mxu0
    %v1448 = vpop.f32.mrb[0].mxu0
    %v1449 = vadd.f32 %v261, %v1448
    %v1450 = vpop.f32.mrb[0].mxu0
    %1451 = vmatprep.mubr.bf16.mxu0 0
    %1452 = vmatmul.mubr.bf16.gmra.mrb[0].mxu0 %v720
    %v1453 = vpop.f32.mrb[0].mxu0
    %v1454 = vadd.f32 %v261, %v1453
    %v1455 = vpop.f32.mrb[0].mxu0
    %v1456 = vpop.f32.mrb[0].mxu0
    %v1457 = vadd.f32 %v261, %v1456
    %v1458 = vpop.f32.mrb[0].mxu0
    %1459 = vmatprep.mubr.bf16.mxu0 0
    %1460 = vmatmul.mubr.bf16.gmra.mrb[0].mxu0 %v721
    %v1461 = vpop.f32.mrb[0].mxu0
    %v1462 = vadd.f32 %v261, %v1461
    %v1463 = vpop.f32.mrb[0].mxu0
    %v1464 = vpop.f32.mrb[0].mxu0
    %v1465 = vadd.f32 %v261, %v1464
    %v1466 = vpop.f32.mrb[0].mxu0
    %1467 = vmatprep.mubr.bf16.mxu0 0
    %1468 = vmatmul.mubr.bf16.gmra.mrb[0].mxu0 %v722
    %v1469 = vpop.f32.mrb[0].mxu0
    %v1470 = vadd.f32 %v261, %v1469
    %v1471 = vpop.f32.mrb[0].mxu0
    %v1472 = vpop.f32.mrb[0].mxu0
    %v1473 = vadd.f32 %v261, %v1472
    %v1474 = vpop.f32.mrb[0].mxu0
    %1475 = vmatprep.mubr.bf16.mxu0 0
    %1476 = vmatmul.mubr.bf16.gmra.mrb[0].mxu0 %v723
    %v1477 = vpop.f32.mrb[0].mxu0
    %v1478 = vadd.f32 %v261, %v1477
    %v1479 = vpop.f32.mrb[0].mxu0
    %v1480 = vpop.f32.mrb[0].mxu0
    %v1481 = vadd.f32 %v261, %v1480
    %v1482 = vpop.f32.mrb[0].mxu0
    %1483 = vmatprep.mubr.bf16.mxu0 0
    %1484 = vmatmul.mubr.bf16.gmra.mrb[0].mxu0 %v724
    %v1485 = vpop.f32.mrb[0].mxu0
    %v1486 = vadd.f32 %v261, %v1485
    %v1487 = vpop.f32.mrb[0].mxu0
    %v1488 = vpop.f32.mrb[0].mxu0
    %v1489 = vadd.f32 %v261, %v1488
    %v1490 = vpop.f32.mrb[0].mxu0
    %1491 = vmatprep.mubr.bf16.mxu0 0
    %1492 = vmatmul.mubr.bf16.gmra.mrb[0].mxu0 %v725
    %v1493 = vpop.f32.mrb[0].mxu0
    %v1494 = vadd.f32 %v261, %v1493
    %v1495 = vpop.f32.mrb[0].mxu0
    %v1496 = vpop.f32.mrb[0].mxu0
    %v1497 = vadd.f32 %v261, %v1496
    %v1498 = vpop.f32.mrb[0].mxu0
    %1499 = vmatprep.mubr.bf16.mxu0 0
    %1500 = vmatmul.mubr.bf16.gmra.mrb[0].mxu0 %v726
    %v1501 = vpop.f32.mrb[0].mxu0
    %v1502 = vadd.f32 %v261, %v1501
    %v1503 = vpop.f32.mrb[0].mxu0
    %v1504 = vpop.f32.mrb[0].mxu0
    %v1505 = vadd.f32 %v261, %v1504
    %v1506 = vpop.f32.mrb[0].mxu0
    %1507 = vmatprep.mubr.bf16.mxu0 0
    %1508 = vmatmul.mubr.bf16.gmra.mrb[0].mxu0 %v727
    %v1509 = vpop.f32.mrb[0].mxu0
    %v1510 = vadd.f32 %v261, %v1509
    %v1511 = vpop.f32.mrb[0].mxu0
    %v1512 = vpop.f32.mrb[0].mxu0
    %v1513 = vadd.f32 %v261, %v1512
    %v1514 = vpop.f32.mrb[0].mxu0
    %1515 = vmatprep.mubr.bf16.mxu0 0
    %1516 = vmatmul.mubr.bf16.gmra.mrb[0].mxu0 %v728
    %v1517 = vpop.f32.mrb[0].mxu0
    %v1518 = vadd.f32 %v261, %v1517
    %v1519 = vpop.f32.mrb[0].mxu0
    %v1520 = vpop.f32.mrb[0].mxu0
    %v1521 = vadd.f32 %v261, %v1520
    %v1522 = vpop.f32.mrb[0].mxu0
    %1523 = vmatprep.mubr.bf16.mxu0 0
    %1524 = vmatmul.mubr.bf16.gmra.mrb[0].mxu0 %v729
    %v1525 = vpop.f32.mrb[0].mxu0
    %v1526 = vadd.f32 %v261, %v1525
    %v1527 = vpop.f32.mrb[0].mxu0
    %v1528 = vpop.f32.mrb[0].mxu0
    %v1529 = vadd.f32 %v261, %v1528
    %v1530 = vpop.f32.mrb[0].mxu0
    %1531 = vmatprep.mubr.bf16.mxu0 0
    %1532 = vmatmul.mubr.bf16.gmra.mrb[0].mxu0 %v730
    %v1533 = vpop.f32.mrb[0].mxu0
    %v1534 = vadd.f32 %v261, %v1533
    %v1535 = vpop.f32.mrb[0].mxu0
    %v1536 = vpop.f32.mrb[0].mxu0
    %v1537 = vadd.f32 %v261, %v1536
    %v1538 = vpop.f32.mrb[0].mxu0
    %1539 = vmatprep.mubr.bf16.mxu0 0
    %1540 = vmatmul.mubr.bf16.gmra.mrb[0].mxu0 %v731
    %v1541 = vpop.f32.mrb[0].mxu0
    %v1542 = vadd.f32 %v261, %v1541
    %v1543 = vpop.f32.mrb[0].mxu0
    %v1544 = vpop.f32.mrb[0].mxu0
    %v1545 = vadd.f32 %v261, %v1544
    %v1546 = vpop.f32.mrb[0].mxu0
    %1547 = vmatprep.mubr.bf16.mxu0 0
    %1548 = vmatmul.mubr.bf16.gmra.mrb[0].mxu0 %v732
    %v1549 = vpop.f32.mrb[0].mxu0
    %v1550 = vadd.f32 %v261, %v1549
    %v1551 = vpop.f32.mrb[0].mxu0
    %v1552 = vpop.f32.mrb[0].mxu0
    %v1553 = vadd.f32 %v261, %v1552
    %v1554 = vpop.f32.mrb[0].mxu0
    %1555 = vmatprep.mubr.bf16.mxu0 0
    %1556 = vmatmul.mubr.bf16.gmra.mrb[0].mxu0 %v733
    %v1557 = vpop.f32.mrb[0].mxu0
    %v1558 = vadd.f32 %v261, %v1557
    %v1559 = vpop.f32.mrb[0].mxu0
    %v1560 = vpop.f32.mrb[0].mxu0
    %v1561 = vadd.f32 %v261, %v1560
    %v1562 = vpop.f32.mrb[0].mxu0
    %1563 = vmatprep.mubr.bf16.mxu0 0
    %1564 = vmatmul.mubr.bf16.gmra.mrb[0].mxu0 %v734
    %v1565 = vpop.f32.mrb[0].mxu0
    %v1566 = vadd.f32 %v261, %v1565
    %v1567 = vpop.f32.mrb[0].mxu0
    %v1568 = vpop.f32.mrb[0].mxu0
    %v1569 = vadd.f32 %v261, %v1568
    %v1570 = vpop.f32.mrb[0].mxu0
    %1571 = vmatprep.mubr.bf16.mxu0 0
    %1572 = vmatmul.mubr.bf16.gmra.mrb[0].mxu0 %v735
    %v1573 = vpop.f32.mrb[0].mxu0
    %v1574 = vadd.f32 %v261, %v1573
    %v1575 = vpop.f32.mrb[0].mxu0
    %v1576 = vpop.f32.mrb[0].mxu0
    %v1577 = vadd.f32 %v261, %v1576
    %v1578 = vpop.f32.mrb[0].mxu0
    %1579 = vmatprep.mubr.bf16.mxu0 0
    %1580 = vmatmul.mubr.bf16.gmra.mrb[0].mxu0 %v736
    %v1581 = vpop.f32.mrb[0].mxu0
    %v1582 = vadd.f32 %v261, %v1581
    %v1583 = vpop.f32.mrb[0].mxu0
    %v1584 = vpop.f32.mrb[0].mxu0
    %v1585 = vadd.f32 %v261, %v1584
    %v1586 = vpop.f32.mrb[0].mxu0
    %1587 = vmatprep.mubr.bf16.mxu0 0
    %1588 = vmatmul.mubr.bf16.gmra.mrb[0].mxu0 %v737
    %v1589 = vpop.f32.mrb[0].mxu0
    %v1590 = vadd.f32 %v261, %v1589
    %v1591 = vpop.f32.mrb[0].mxu0
    %v1592 = vpop.f32.mrb[0].mxu0
    %v1593 = vadd.f32 %v261, %v1592
    %v1594 = vpop.f32.mrb[0].mxu0
    %1595 = vmatprep.mubr.bf16.mxu0 0
    %1596 = vmatmul.mubr.bf16.gmra.mrb[0].mxu0 %v738
    %v1597 = vpop.f32.mrb[0].mxu0
    %v1598 = vadd.f32 %v261, %v1597
    %v1599 = vpop.f32.mrb[0].mxu0
    %v1600 = vpop.f32.mrb[0].mxu0
    %v1601 = vadd.f32 %v261, %v1600
    %v1602 = vpop.f32.mrb[0].mxu0
    %1603 = vmatprep.mubr.bf16.mxu0 0
    %1604 = vmatmul.mubr.bf16.gmra.mrb[0].mxu0 %v739
    %v1605 = vpop.f32.mrb[0].mxu0
    %v1606 = vadd.f32 %v261, %v1605
    %v1607 = vpop.f32.mrb[0].mxu0
    %v1608 = vpop.f32.mrb[0].mxu0
    %v1609 = vadd.f32 %v261, %v1608
    %v1610 = vpop.f32.mrb[0].mxu0
    %1611 = vmatprep.mubr.bf16.mxu0 0
    %1612 = vmatmul.mubr.bf16.gmra.mrb[0].mxu0 %v740
    %v1613 = vpop.f32.mrb[0].mxu0
    %v1614 = vadd.f32 %v261, %v1613
    %v1615 = vpop.f32.mrb[0].mxu0
    %v1616 = vpop.f32.mrb[0].mxu0
    %v1617 = vadd.f32 %v261, %v1616
    %v1618 = vpop.f32.mrb[0].mxu0
    %1619 = vmatprep.mubr.bf16.mxu0 0
    %1620 = vmatmul.mubr.bf16.gmra.mrb[0].mxu0 %v741
    %v1621 = vpop.f32.mrb[0].mxu0
    %v1622 = vadd.f32 %v261, %v1621
    %v1623 = vpop.f32.mrb[0].mxu0
    %v1624 = vpop.f32.mrb[0].mxu0
    %v1625 = vadd.f32 %v261, %v1624
    %v1626 = vpop.f32.mrb[0].mxu0
    %1627 = vmatprep.mubr.bf16.mxu0 0
    %1628 = vmatmul.mubr.bf16.gmra.mrb[0].mxu0 %v742
    %v1629 = vpop.f32.mrb[0].mxu0
    %v1630 = vadd.f32 %v261, %v1629
    %v1631 = vpop.f32.mrb[0].mxu0
    %v1632 = vpop.f32.mrb[0].mxu0
    %v1633 = vadd.f32 %v261, %v1632
    %v1634 = vpop.f32.mrb[0].mxu0
    %1635 = vmatprep.mubr.bf16.mxu0 0
    %1636 = vmatmul.mubr.bf16.gmra.mrb[0].mxu0 %v743
    %v1637 = vpop.f32.mrb[0].mxu0
    %v1638 = vadd.f32 %v261, %v1637
    %v1639 = vpop.f32.mrb[0].mxu0
    %v1640 = vpop.f32.mrb[0].mxu0
    %v1641 = vadd.f32 %v261, %v1640
    %v1642 = vpop.f32.mrb[0].mxu0
    %1643 = vmatprep.mubr.bf16.mxu0 0
    %1644 = vmatmul.mubr.bf16.gmra.mrb[0].mxu0 %v744
    %v1645 = vpop.f32.mrb[0].mxu0
    %v1646 = vadd.f32 %v261, %v1645
    %v1647 = vpop.f32.mrb[0].mxu0
    %v1648 = vpop.f32.mrb[0].mxu0
    %v1649 = vadd.f32 %v261, %v1648
    %v1650 = vpop.f32.mrb[0].mxu0
    %1651 = vmatprep.mubr.bf16.mxu0 0
    %1652 = vmatmul.mubr.bf16.gmra.mrb[0].mxu0 %v745
    %v1653 = vpop.f32.mrb[0].mxu0
    %v1654 = vadd.f32 %v261, %v1653
    %v1655 = vpop.f32.mrb[0].mxu0
    %v1656 = vpop.f32.mrb[0].mxu0
    %v1657 = vadd.f32 %v261, %v1656
    %v1658 = vpop.f32.mrb[0].mxu0
    %1659 = vmatprep.mubr.bf16.mxu0 0
    %1660 = vmatmul.mubr.bf16.gmra.mrb[0].mxu0 %v746
    %v1661 = vpop.f32.mrb[0].mxu0
    %v1662 = vadd.f32 %v261, %v1661
    %v1663 = vpop.f32.mrb[0].mxu0
    %v1664 = vpop.f32.mrb[0].mxu0
    %v1665 = vadd.f32 %v261, %v1664
    %v1666 = vpop.f32.mrb[0].mxu0
    %1667 = vmatprep.mubr.bf16.mxu0 0
    %1668 = vmatmul.mubr.bf16.gmra.mrb[0].mxu0 %v747
    %v1669 = vpop.f32.mrb[0].mxu0
    %v1670 = vadd.f32 %v261, %v1669
    %v1671 = vpop.f32.mrb[0].mxu0
    %v1672 = vpop.f32.mrb[0].mxu0
    %v1673 = vadd.f32 %v261, %v1672
    %v1674 = vpop.f32.mrb[0].mxu0
    %1675 = vmatprep.mubr.bf16.mxu0 0
    %1676 = vmatmul.mubr.bf16.gmra.mrb[0].mxu0 %v748
    %v1677 = vpop.f32.mrb[0].mxu0
    %v1678 = vadd.f32 %v261, %v1677
    %v1679 = vpop.f32.mrb[0].mxu0
    %v1680 = vpop.f32.mrb[0].mxu0
    %v1681 = vadd.f32 %v261, %v1680
    %v1682 = vpop.f32.mrb[0].mxu0
    %1683 = vmatprep.mubr.bf16.mxu0 0
    %1684 = vmatmul.mubr.bf16.gmra.mrb[0].mxu0 %v749
    %v1685 = vpop.f32.mrb[0].mxu0
    %v1686 = vadd.f32 %v261, %v1685
    %v1687 = vpop.f32.mrb[0].mxu0
    %v1688 = vpop.f32.mrb[0].mxu0
    %v1689 = vadd.f32 %v261, %v1688
    %v1690 = vpop.f32.mrb[0].mxu0
    %1691 = vmatprep.mubr.bf16.mxu0 0
    %1692 = vmatmul.mubr.bf16.gmra.mrb[0].mxu0 %v750
    %v1693 = vpop.f32.mrb[0].mxu0
    %v1694 = vadd.f32 %v261, %v1693
    %v1695 = vpop.f32.mrb[0].mxu0
    %v1696 = vpop.f32.mrb[0].mxu0
    %v1697 = vadd.f32 %v261, %v1696
    %v1698 = vpop.f32.mrb[0].mxu0
    %1699 = vmatprep.mubr.bf16.mxu0 0
    %1700 = vmatmul.mubr.bf16.gmra.mrb[0].mxu0 %v751
    %v1701 = vpop.f32.mrb[0].mxu0
    %v1702 = vadd.f32 %v261, %v1701
    %v1703 = vpop.f32.mrb[0].mxu0
    %v1704 = vpop.f32.mrb[0].mxu0
    %v1705 = vadd.f32 %v261, %v1704
    %v1706 = vpop.f32.mrb[0].mxu0
    %1707 = vmatprep.mubr.bf16.mxu0 0
    %1708 = vmatmul.mubr.bf16.gmra.mrb[0].mxu0 %v752
    %v1709 = vpop.f32.mrb[0].mxu0
    %v1710 = vadd.f32 %v261, %v1709
    %v1711 = vpop.f32.mrb[0].mxu0
    %v1712 = vpop.f32.mrb[0].mxu0
    %v1713 = vadd.f32 %v261, %v1712
    %v1714 = vpop.f32.mrb[0].mxu0
    %1715 = vdwg.mxu0
    %v1716 = vmax.f32 %v934, 0.0
    %v1717 = vmax.f32 %v937, 0.0
    %v1718 = vmax.f32 %v942, 0.0
    %v1719 = vmax.f32 %v945, 0.0
    %v1720 = vmax.f32 %v950, 0.0
    %v1721 = vmax.f32 %v953, 0.0
    %v1722 = vmax.f32 %v958, 0.0
    %v1723 = vmax.f32 %v961, 0.0
    %v1724 = vmax.f32 %v966, 0.0
    %v1725 = vmax.f32 %v969, 0.0
    %v1726 = vmax.f32 %v974, 0.0
    %v1727 = vmax.f32 %v977, 0.0
    %v1728 = vmax.f32 %v982, 0.0
    %v1729 = vmax.f32 %v985, 0.0
    %v1730 = vmax.f32 %v990, 0.0
    %v1731 = vmax.f32 %v993, 0.0
    %v1732 = vmax.f32 %v998, 0.0
    %v1733 = vmax.f32 %v1001, 0.0
    %v1734 = vmax.f32 %v1006, 0.0
    %v1735 = vmax.f32 %v1009, 0.0
    %v1736 = vmax.f32 %v1014, 0.0
    %v1737 = vmax.f32 %v1017, 0.0
    %v1738 = vmax.f32 %v1022, 0.0
    %v1739 = vmax.f32 %v1025, 0.0
    %v1740 = vmax.f32 %v1030, 0.0
    %v1741 = vmax.f32 %v1033, 0.0
    %v1742 = vmax.f32 %v1038, 0.0
    %v1743 = vmax.f32 %v1041, 0.0
    %v1744 = vmax.f32 %v1046, 0.0
    %v1745 = vmax.f32 %v1049, 0.0
    %v1746 = vmax.f32 %v1054, 0.0
    %v1747 = vmax.f32 %v1057, 0.0
    %v1748 = vmax.f32 %v1062, 0.0
    %v1749 = vmax.f32 %v1065, 0.0
    %v1750 = vmax.f32 %v1070, 0.0
    %v1751 = vmax.f32 %v1073, 0.0
    %v1752 = vmax.f32 %v1078, 0.0
    %v1753 = vmax.f32 %v1081, 0.0
    %v1754 = vmax.f32 %v1086, 0.0
    %v1755 = vmax.f32 %v1089, 0.0
    %v1756 = vmax.f32 %v1094, 0.0
    %v1757 = vmax.f32 %v1097, 0.0
    %v1758 = vmax.f32 %v1102, 0.0
    %v1759 = vmax.f32 %v1105, 0.0
    %v1760 = vmax.f32 %v1110, 0.0
    %v1761 = vmax.f32 %v1113, 0.0
    %v1762 = vmax.f32 %v1118, 0.0
    %v1763 = vmax.f32 %v1121, 0.0
    %v1764 = vmax.f32 %v1126, 0.0
    %v1765 = vmax.f32 %v1129, 0.0
    %v1766 = vmax.f32 %v1134, 0.0
    %v1767 = vmax.f32 %v1137, 0.0
    %v1768 = vmax.f32 %v1142, 0.0
    %v1769 = vmax.f32 %v1145, 0.0
    %v1770 = vmax.f32 %v1150, 0.0
    %v1771 = vmax.f32 %v1153, 0.0
    %v1772 = vmax.f32 %v1158, 0.0
    %v1773 = vmax.f32 %v1161, 0.0
    %v1774 = vmax.f32 %v1166, 0.0
    %v1775 = vmax.f32 %v1169, 0.0
    %v1776 = vmax.f32 %v1174, 0.0
    %v1777 = vmax.f32 %v1177, 0.0
    %v1778 = vmax.f32 %v1182, 0.0
    %v1779 = vmax.f32 %v1185, 0.0
    %v1780 = vmax.f32 %v1190, 0.0
    %v1781 = vmax.f32 %v1193, 0.0
    %v1782 = vmax.f32 %v1198, 0.0
    %v1783 = vmax.f32 %v1201, 0.0
    %v1784 = vmax.f32 %v1206, 0.0
    %v1785 = vmax.f32 %v1209, 0.0
    %v1786 = vmax.f32 %v1214, 0.0
    %v1787 = vmax.f32 %v1217, 0.0
    %v1788 = vmax.f32 %v1222, 0.0
    %v1789 = vmax.f32 %v1225, 0.0
    %v1790 = vmax.f32 %v1230, 0.0
    %v1791 = vmax.f32 %v1233, 0.0
    %v1792 = vmax.f32 %v1238, 0.0
    %v1793 = vmax.f32 %v1241, 0.0
    %v1794 = vmax.f32 %v1246, 0.0
    %v1795 = vmax.f32 %v1249, 0.0
    %v1796 = vmax.f32 %v1254, 0.0
    %v1797 = vmax.f32 %v1257, 0.0
    %v1798 = vmax.f32 %v1262, 0.0
    %v1799 = vmax.f32 %v1265, 0.0
    %v1800 = vmax.f32 %v1270, 0.0
    %v1801 = vmax.f32 %v1273, 0.0
    %v1802 = vmax.f32 %v1278, 0.0
    %v1803 = vmax.f32 %v1281, 0.0
    %v1804 = vmax.f32 %v1286, 0.0
    %v1805 = vmax.f32 %v1289, 0.0
    %v1806 = vmax.f32 %v1294, 0.0
    %v1807 = vmax.f32 %v1297, 0.0
    %v1808 = vmax.f32 %v1302, 0.0
    %v1809 = vmax.f32 %v1305, 0.0
    %v1810 = vmax.f32 %v1310, 0.0
    %v1811 = vmax.f32 %v1313, 0.0
    %v1812 = vmax.f32 %v1318, 0.0
    %v1813 = vmax.f32 %v1321, 0.0
    %v1814 = vmax.f32 %v1326, 0.0
    %v1815 = vmax.f32 %v1329, 0.0
    %v1816 = vmax.f32 %v1334, 0.0
    %v1817 = vmax.f32 %v1337, 0.0
    %v1818 = vmax.f32 %v1342, 0.0
    %v1819 = vmax.f32 %v1345, 0.0
    %v1820 = vmax.f32 %v1350, 0.0
    %v1821 = vmax.f32 %v1353, 0.0
    %v1822 = vmax.f32 %v1358, 0.0
    %v1823 = vmax.f32 %v1361, 0.0
    %v1824 = vmax.f32 %v1366, 0.0
    %v1825 = vmax.f32 %v1369, 0.0
    %v1826 = vmax.f32 %v1374, 0.0
    %v1827 = vmax.f32 %v1377, 0.0
    %v1828 = vmax.f32 %v1382, 0.0
    %v1829 = vmax.f32 %v1385, 0.0
    %v1830 = vmax.f32 %v1390, 0.0
    %v1831 = vmax.f32 %v1393, 0.0
    %v1832 = vmax.f32 %v1398, 0.0
    %v1833 = vmax.f32 %v1401, 0.0
    %v1834 = vmax.f32 %v1406, 0.0
    %v1835 = vmax.f32 %v1409, 0.0
    %v1836 = vmax.f32 %v1414, 0.0
    %v1837 = vmax.f32 %v1417, 0.0
    %v1838 = vmax.f32 %v1422, 0.0
    %v1839 = vmax.f32 %v1425, 0.0
    %v1840 = vmax.f32 %v1430, 0.0
    %v1841 = vmax.f32 %v1433, 0.0
    %v1842 = vmax.f32 %v1438, 0.0
    %v1843 = vmax.f32 %v1441, 0.0
    %v1844 = vmax.f32 %v1446, 0.0
    %v1845 = vmax.f32 %v1449, 0.0
    %v1846 = vmax.f32 %v1454, 0.0
    %v1847 = vmax.f32 %v1457, 0.0
    %v1848 = vmax.f32 %v1462, 0.0
    %v1849 = vmax.f32 %v1465, 0.0
    %v1850 = vmax.f32 %v1470, 0.0
    %v1851 = vmax.f32 %v1473, 0.0
    %v1852 = vmax.f32 %v1478, 0.0
    %v1853 = vmax.f32 %v1481, 0.0
    %v1854 = vmax.f32 %v1486, 0.0
    %v1855 = vmax.f32 %v1489, 0.0
    %v1856 = vmax.f32 %v1494, 0.0
    %v1857 = vmax.f32 %v1497, 0.0
    %v1858 = vmax.f32 %v1502, 0.0
    %v1859 = vmax.f32 %v1505, 0.0
    %v1860 = vmax.f32 %v1510, 0.0
    %v1861 = vmax.f32 %v1513, 0.0
    %v1862 = vmax.f32 %v1518, 0.0
    %v1863 = vmax.f32 %v1521, 0.0
    %v1864 = vmax.f32 %v1526, 0.0
    %v1865 = vmax.f32 %v1529, 0.0
    %v1866 = vmax.f32 %v1534, 0.0
    %v1867 = vmax.f32 %v1537, 0.0
    %v1868 = vmax.f32 %v1542, 0.0
    %v1869 = vmax.f32 %v1545, 0.0
    %v1870 = vmax.f32 %v1550, 0.0
    %v1871 = vmax.f32 %v1553, 0.0
    %v1872 = vmax.f32 %v1558, 0.0
    %v1873 = vmax.f32 %v1561, 0.0
    %v1874 = vmax.f32 %v1566, 0.0
    %v1875 = vmax.f32 %v1569, 0.0
    %v1876 = vmax.f32 %v1574, 0.0
    %v1877 = vmax.f32 %v1577, 0.0
    %v1878 = vmax.f32 %v1582, 0.0
    %v1879 = vmax.f32 %v1585, 0.0
    %v1880 = vmax.f32 %v1590, 0.0
    %v1881 = vmax.f32 %v1593, 0.0
    %v1882 = vmax.f32 %v1598, 0.0
    %v1883 = vmax.f32 %v1601, 0.0
    %v1884 = vmax.f32 %v1606, 0.0
    %v1885 = vmax.f32 %v1609, 0.0
    %v1886 = vmax.f32 %v1614, 0.0
    %v1887 = vmax.f32 %v1617, 0.0
    %v1888 = vmax.f32 %v1622, 0.0
    %v1889 = vmax.f32 %v1625, 0.0
    %v1890 = vmax.f32 %v1630, 0.0
    %v1891 = vmax.f32 %v1633, 0.0
    %v1892 = vmax.f32 %v1638, 0.0
    %v1893 = vmax.f32 %v1641, 0.0
    %v1894 = vmax.f32 %v1646, 0.0
    %v1895 = vmax.f32 %v1649, 0.0
    %v1896 = vmax.f32 %v1654, 0.0
    %v1897 = vmax.f32 %v1657, 0.0
    %v1898 = vmax.f32 %v1662, 0.0
    %v1899 = vmax.f32 %v1665, 0.0
    %v1900 = vmax.f32 %v1670, 0.0
    %v1901 = vmax.f32 %v1673, 0.0
    %v1902 = vmax.f32 %v1678, 0.0
    %v1903 = vmax.f32 %v1681, 0.0
    %v1904 = vmax.f32 %v1686, 0.0
    %v1905 = vmax.f32 %v1689, 0.0
    %v1906 = vmax.f32 %v1694, 0.0
    %v1907 = vmax.f32 %v1697, 0.0
    %v1908 = vmax.f32 %v1702, 0.0
    %v1909 = vmax.f32 %v1705, 0.0
    %v1910 = vmax.f32 %v1710, 0.0
    %v1911 = vmax.f32 %v1713, 0.0
    %1912 = vst [vmem:[#allocation7] sm:$0xff] %v1716
    %1913 = vst [vmem:[#allocation7 + $0x8] sm:$0xff] %v1717
    %1914 = vst [vmem:[#allocation7 + $0x10] sm:$0xff] %v1718
    %1915 = vst [vmem:[#allocation7 + $0x18] sm:$0xff] %v1719
    %1916 = vst [vmem:[#allocation7 + $0x20] sm:$0xff] %v1720
    %1917 = vst [vmem:[#allocation7 + $0x28] sm:$0xff] %v1721
    %1918 = vst [vmem:[#allocation7 + $0x30] sm:$0xff] %v1722
    %1919 = vst [vmem:[#allocation7 + $0x38] sm:$0xff] %v1723
    %1920 = vst [vmem:[#allocation7 + $0x40] sm:$0xff] %v1724
    %1921 = vst [vmem:[#allocation7 + $0x48] sm:$0xff] %v1725
    %1922 = vst [vmem:[#allocation7 + $0x50] sm:$0xff] %v1726
    %1923 = vst [vmem:[#allocation7 + $0x58] sm:$0xff] %v1727
    %1924 = vst [vmem:[#allocation7 + $0x60] sm:$0xff] %v1728
    %1925 = vst [vmem:[#allocation7 + $0x68] sm:$0xff] %v1729
    %1926 = vst [vmem:[#allocation7 + $0x70] sm:$0xff] %v1730
    %1927 = vst [vmem:[#allocation7 + $0x78] sm:$0xff] %v1731
    %1928 = vst [vmem:[#allocation7 + $0x80] sm:$0xff] %v1732
    %1929 = vst [vmem:[#allocation7 + $0x88] sm:$0xff] %v1733
    %1930 = vst [vmem:[#allocation7 + $0x90] sm:$0xff] %v1734
    %1931 = vst [vmem:[#allocation7 + $0x98] sm:$0xff] %v1735
    %1932 = vst [vmem:[#allocation7 + $0xa0] sm:$0xff] %v1736
    %1933 = vst [vmem:[#allocation7 + $0xa8] sm:$0xff] %v1737
    %1934 = vst [vmem:[#allocation7 + $0xb0] sm:$0xff] %v1738
    %1935 = vst [vmem:[#allocation7 + $0xb8] sm:$0xff] %v1739
    %1936 = vst [vmem:[#allocation7 + $0xc0] sm:$0xff] %v1740
    %1937 = vst [vmem:[#allocation7 + $0xc8] sm:$0xff] %v1741
    %1938 = vst [vmem:[#allocation7 + $0xd0] sm:$0xff] %v1742
    %1939 = vst [vmem:[#allocation7 + $0xd8] sm:$0xff] %v1743
    %1940 = vst [vmem:[#allocation7 + $0xe0] sm:$0xff] %v1744
    %1941 = vst [vmem:[#allocation7 + $0xe8] sm:$0xff] %v1745
    %1942 = vst [vmem:[#allocation7 + $0xf0] sm:$0xff] %v1746
    %1943 = vst [vmem:[#allocation7 + $0xf8] sm:$0xff] %v1747
    %1944 = vst [vmem:[#allocation7 + $0x100] sm:$0xff] %v1748
    %1945 = vst [vmem:[#allocation7 + $0x108] sm:$0xff] %v1749
    %1946 = vst [vmem:[#allocation7 + $0x110] sm:$0xff] %v1750
    %1947 = vst [vmem:[#allocation7 + $0x118] sm:$0xff] %v1751
    %1948 = vst [vmem:[#allocation7 + $0x120] sm:$0xff] %v1752
    %1949 = vst [vmem:[#allocation7 + $0x128] sm:$0xff] %v1753
    %1950 = vst [vmem:[#allocation7 + $0x130] sm:$0xff] %v1754
    %1951 = vst [vmem:[#allocation7 + $0x138] sm:$0xff] %v1755
    %1952 = vst [vmem:[#allocation7 + $0x140] sm:$0xff] %v1756
    %1953 = vst [vmem:[#allocation7 + $0x148] sm:$0xff] %v1757
    %1954 = vst [vmem:[#allocation7 + $0x150] sm:$0xff] %v1758
    %1955 = vst [vmem:[#allocation7 + $0x158] sm:$0xff] %v1759
    %1956 = vst [vmem:[#allocation7 + $0x160] sm:$0xff] %v1760
    %1957 = vst [vmem:[#allocation7 + $0x168] sm:$0xff] %v1761
    %1958 = vst [vmem:[#allocation7 + $0x170] sm:$0xff] %v1762
    %1959 = vst [vmem:[#allocation7 + $0x178] sm:$0xff] %v1763
    %1960 = vst [vmem:[#allocation7 + $0x180] sm:$0xff] %v1764
    %1961 = vst [vmem:[#allocation7 + $0x188] sm:$0xff] %v1765
    %1962 = vst [vmem:[#allocation7 + $0x190] sm:$0xff] %v1766
    %1963 = vst [vmem:[#allocation7 + $0x198] sm:$0xff] %v1767
    %1964 = vst [vmem:[#allocation7 + $0x1a0] sm:$0xff] %v1768
    %1965 = vst [vmem:[#allocation7 + $0x1a8] sm:$0xff] %v1769
    %1966 = vst [vmem:[#allocation7 + $0x1b0] sm:$0xff] %v1770
    %1967 = vst [vmem:[#allocation7 + $0x1b8] sm:$0xff] %v1771
    %1968 = vst [vmem:[#allocation7 + $0x1c0] sm:$0xff] %v1772
    %1969 = vst [vmem:[#allocation7 + $0x1c8] sm:$0xff] %v1773
    %1970 = vst [vmem:[#allocation7 + $0x1d0] sm:$0xff] %v1774
    %1971 = vst [vmem:[#allocation7 + $0x1d8] sm:$0xff] %v1775
    %1972 = vst [vmem:[#allocation7 + $0x1e0] sm:$0xff] %v1776
    %1973 = vst [vmem:[#allocation7 + $0x1e8] sm:$0xff] %v1777
    %1974 = vst [vmem:[#allocation7 + $0x1f0] sm:$0xff] %v1778
    %1975 = vst [vmem:[#allocation7 + $0x1f8] sm:$0xff] %v1779
    %1976 = vst [vmem:[#allocation7 + $0x200] sm:$0xff] %v1780
    %1977 = vst [vmem:[#allocation7 + $0x208] sm:$0xff] %v1781
    %1978 = vst [vmem:[#allocation7 + $0x210] sm:$0xff] %v1782
    %1979 = vst [vmem:[#allocation7 + $0x218] sm:$0xff] %v1783
    %1980 = vst [vmem:[#allocation7 + $0x220] sm:$0xff] %v1784
    %1981 = vst [vmem:[#allocation7 + $0x228] sm:$0xff] %v1785
    %1982 = vst [vmem:[#allocation7 + $0x230] sm:$0xff] %v1786
    %1983 = vst [vmem:[#allocation7 + $0x238] sm:$0xff] %v1787
    %1984 = vst [vmem:[#allocation7 + $0x240] sm:$0xff] %v1788
    %1985 = vst [vmem:[#allocation7 + $0x248] sm:$0xff] %v1789
    %1986 = vst [vmem:[#allocation7 + $0x250] sm:$0xff] %v1790
    %1987 = vst [vmem:[#allocation7 + $0x258] sm:$0xff] %v1791
    %1988 = vst [vmem:[#allocation7 + $0x260] sm:$0xff] %v1792
    %1989 = vst [vmem:[#allocation7 + $0x268] sm:$0xff] %v1793
    %1990 = vst [vmem:[#allocation7 + $0x270] sm:$0xff] %v1794
    %1991 = vst [vmem:[#allocation7 + $0x278] sm:$0xff] %v1795
    %1992 = vst [vmem:[#allocation7 + $0x280] sm:$0xff] %v1796
    %1993 = vst [vmem:[#allocation7 + $0x288] sm:$0xff] %v1797
    %1994 = vst [vmem:[#allocation7 + $0x290] sm:$0xff] %v1798
    %1995 = vst [vmem:[#allocation7 + $0x298] sm:$0xff] %v1799
    %1996 = vst [vmem:[#allocation7 + $0x2a0] sm:$0xff] %v1800
    %1997 = vst [vmem:[#allocation7 + $0x2a8] sm:$0xff] %v1801
    %1998 = vst [vmem:[#allocation7 + $0x2b0] sm:$0xff] %v1802
    %1999 = vst [vmem:[#allocation7 + $0x2b8] sm:$0xff] %v1803
    %2000 = vst [vmem:[#allocation7 + $0x2c0] sm:$0xff] %v1804
    %2001 = vst [vmem:[#allocation7 + $0x2c8] sm:$0xff] %v1805
    %2002 = vst [vmem:[#allocation7 + $0x2d0] sm:$0xff] %v1806
    %2003 = vst [vmem:[#allocation7 + $0x2d8] sm:$0xff] %v1807
    %2004 = vst [vmem:[#allocation7 + $0x2e0] sm:$0xff] %v1808
    %2005 = vst [vmem:[#allocation7 + $0x2e8] sm:$0xff] %v1809
    %2006 = vst [vmem:[#allocation7 + $0x2f0] sm:$0xff] %v1810
    %2007 = vst [vmem:[#allocation7 + $0x2f8] sm:$0xff] %v1811
    %2008 = vst [vmem:[#allocation7 + $0x300] sm:$0xff] %v1812
    %2009 = vst [vmem:[#allocation7 + $0x308] sm:$0xff] %v1813
    %2010 = vst [vmem:[#allocation7 + $0x310] sm:$0xff] %v1814
    %2011 = vst [vmem:[#allocation7 + $0x318] sm:$0xff] %v1815
    %2012 = vst [vmem:[#allocation7 + $0x320] sm:$0xff] %v1816
    %2013 = vst [vmem:[#allocation7 + $0x328] sm:$0xff] %v1817
    %2014 = vst [vmem:[#allocation7 + $0x330] sm:$0xff] %v1818
    %2015 = vst [vmem:[#allocation7 + $0x338] sm:$0xff] %v1819
    %2016 = vst [vmem:[#allocation7 + $0x340] sm:$0xff] %v1820
    %2017 = vst [vmem:[#allocation7 + $0x348] sm:$0xff] %v1821
    %2018 = vst [vmem:[#allocation7 + $0x350] sm:$0xff] %v1822
    %2019 = vst [vmem:[#allocation7 + $0x358] sm:$0xff] %v1823
    %2020 = vst [vmem:[#allocation7 + $0x360] sm:$0xff] %v1824
    %2021 = vst [vmem:[#allocation7 + $0x368] sm:$0xff] %v1825
    %2022 = vst [vmem:[#allocation7 + $0x370] sm:$0xff] %v1826
    %2023 = vst [vmem:[#allocation7 + $0x378] sm:$0xff] %v1827
    %2024 = vst [vmem:[#allocation7 + $0x380] sm:$0xff] %v1828
    %2025 = vst [vmem:[#allocation7 + $0x388] sm:$0xff] %v1829
    %2026 = vst [vmem:[#allocation7 + $0x390] sm:$0xff] %v1830
    %2027 = vst [vmem:[#allocation7 + $0x398] sm:$0xff] %v1831
    %2028 = vst [vmem:[#allocation7 + $0x3a0] sm:$0xff] %v1832
    %2029 = vst [vmem:[#allocation7 + $0x3a8] sm:$0xff] %v1833
    %2030 = vst [vmem:[#allocation7 + $0x3b0] sm:$0xff] %v1834
    %2031 = vst [vmem:[#allocation7 + $0x3b8] sm:$0xff] %v1835
    %2032 = vst [vmem:[#allocation7 + $0x3c0] sm:$0xff] %v1836
    %2033 = vst [vmem:[#allocation7 + $0x3c8] sm:$0xff] %v1837
    %2034 = vst [vmem:[#allocation7 + $0x3d0] sm:$0xff] %v1838
    %2035 = vst [vmem:[#allocation7 + $0x3d8] sm:$0xff] %v1839
    %2036 = vst [vmem:[#allocation7 + $0x3e0] sm:$0xff] %v1840
    %2037 = vst [vmem:[#allocation7 + $0x3e8] sm:$0xff] %v1841
    %2038 = vst [vmem:[#allocation7 + $0x3f0] sm:$0xff] %v1842
    %2039 = vst [vmem:[#allocation7 + $0x3f8] sm:$0xff] %v1843
    %2040 = vst [vmem:[#allocation7 + $0x400] sm:$0xff] %v1844
    %2041 = vst [vmem:[#allocation7 + $0x408] sm:$0xff] %v1845
    %2042 = vst [vmem:[#allocation7 + $0x410] sm:$0xff] %v1846
    %2043 = vst [vmem:[#allocation7 + $0x418] sm:$0xff] %v1847
    %2044 = vst [vmem:[#allocation7 + $0x420] sm:$0xff] %v1848
    %2045 = vst [vmem:[#allocation7 + $0x428] sm:$0xff] %v1849
    %2046 = vst [vmem:[#allocation7 + $0x430] sm:$0xff] %v1850
    %2047 = vst [vmem:[#allocation7 + $0x438] sm:$0xff] %v1851
    %2048 = vst [vmem:[#allocation7 + $0x440] sm:$0xff] %v1852
    %2049 = vst [vmem:[#allocation7 + $0x448] sm:$0xff] %v1853
    %2050 = vst [vmem:[#allocation7 + $0x450] sm:$0xff] %v1854
    %2051 = vst [vmem:[#allocation7 + $0x458] sm:$0xff] %v1855
    %2052 = vst [vmem:[#allocation7 + $0x460] sm:$0xff] %v1856
    %2053 = vst [vmem:[#allocation7 + $0x468] sm:$0xff] %v1857
    %2054 = vst [vmem:[#allocation7 + $0x470] sm:$0xff] %v1858
    %2055 = vst [vmem:[#allocation7 + $0x478] sm:$0xff] %v1859
    %2056 = vst [vmem:[#allocation7 + $0x480] sm:$0xff] %v1860
    %2057 = vst [vmem:[#allocation7 + $0x488] sm:$0xff] %v1861
    %2058 = vst [vmem:[#allocation7 + $0x490] sm:$0xff] %v1862
    %2059 = vst [vmem:[#allocation7 + $0x498] sm:$0xff] %v1863
    %2060 = vst [vmem:[#allocation7 + $0x4a0] sm:$0xff] %v1864
    %2061 = vst [vmem:[#allocation7 + $0x4a8] sm:$0xff] %v1865
    %2062 = vst [vmem:[#allocation7 + $0x4b0] sm:$0xff] %v1866
    %2063 = vst [vmem:[#allocation7 + $0x4b8] sm:$0xff] %v1867
    %2064 = vst [vmem:[#allocation7 + $0x4c0] sm:$0xff] %v1868
    %2065 = vst [vmem:[#allocation7 + $0x4c8] sm:$0xff] %v1869
    %2066 = vst [vmem:[#allocation7 + $0x4d0] sm:$0xff] %v1870
    %2067 = vst [vmem:[#allocation7 + $0x4d8] sm:$0xff] %v1871
    %2068 = vst [vmem:[#allocation7 + $0x4e0] sm:$0xff] %v1872
    %2069 = vst [vmem:[#allocation7 + $0x4e8] sm:$0xff] %v1873
    %2070 = vst [vmem:[#allocation7 + $0x4f0] sm:$0xff] %v1874
    %2071 = vst [vmem:[#allocation7 + $0x4f8] sm:$0xff] %v1875
    %2072 = vst [vmem:[#allocation7 + $0x500] sm:$0xff] %v1876
    %2073 = vst [vmem:[#allocation7 + $0x508] sm:$0xff] %v1877
    %2074 = vst [vmem:[#allocation7 + $0x510] sm:$0xff] %v1878
    %2075 = vst [vmem:[#allocation7 + $0x518] sm:$0xff] %v1879
    %2076 = vst [vmem:[#allocation7 + $0x520] sm:$0xff] %v1880
    %2077 = vst [vmem:[#allocation7 + $0x528] sm:$0xff] %v1881
    %2078 = vst [vmem:[#allocation7 + $0x530] sm:$0xff] %v1882
    %2079 = vst [vmem:[#allocation7 + $0x538] sm:$0xff] %v1883
    %2080 = vst [vmem:[#allocation7 + $0x540] sm:$0xff] %v1884
    %2081 = vst [vmem:[#allocation7 + $0x548] sm:$0xff] %v1885
    %2082 = vst [vmem:[#allocation7 + $0x550] sm:$0xff] %v1886
    %2083 = vst [vmem:[#allocation7 + $0x558] sm:$0xff] %v1887
    %2084 = vst [vmem:[#allocation7 + $0x560] sm:$0xff] %v1888
    %2085 = vst [vmem:[#allocation7 + $0x568] sm:$0xff] %v1889
    %2086 = vst [vmem:[#allocation7 + $0x570] sm:$0xff] %v1890
    %2087 = vst [vmem:[#allocation7 + $0x578] sm:$0xff] %v1891
    %2088 = vst [vmem:[#allocation7 + $0x580] sm:$0xff] %v1892
    %2089 = vst [vmem:[#allocation7 + $0x588] sm:$0xff] %v1893
    %2090 = vst [vmem:[#allocation7 + $0x590] sm:$0xff] %v1894
    %2091 = vst [vmem:[#allocation7 + $0x598] sm:$0xff] %v1895
    %2092 = vst [vmem:[#allocation7 + $0x5a0] sm:$0xff] %v1896
    %2093 = vst [vmem:[#allocation7 + $0x5a8] sm:$0xff] %v1897
    %2094 = vst [vmem:[#allocation7 + $0x5b0] sm:$0xff] %v1898
    %2095 = vst [vmem:[#allocation7 + $0x5b8] sm:$0xff] %v1899
    %2096 = vst [vmem:[#allocation7 + $0x5c0] sm:$0xff] %v1900
    %2097 = vst [vmem:[#allocation7 + $0x5c8] sm:$0xff] %v1901
    %2098 = vst [vmem:[#allocation7 + $0x5d0] sm:$0xff] %v1902
    %2099 = vst [vmem:[#allocation7 + $0x5d8] sm:$0xff] %v1903
    %2100 = vst [vmem:[#allocation7 + $0x5e0] sm:$0xff] %v1904
    %2101 = vst [vmem:[#allocation7 + $0x5e8] sm:$0xff] %v1905
    %2102 = vst [vmem:[#allocation7 + $0x5f0] sm:$0xff] %v1906
    %2103 = vst [vmem:[#allocation7 + $0x5f8] sm:$0xff] %v1907
    %2104 = vst [vmem:[#allocation7 + $0x600] sm:$0xff] %v1908
    %2105 = vst [vmem:[#allocation7 + $0x608] sm:$0xff] %v1909
    %2106 = vst [vmem:[#allocation7 + $0x610] sm:$0xff] %v1910
    %2107 = vst [vmem:[#allocation7 + $0x618] sm:$0xff] %v1911
    // Predicated region
    $region22: #{tpu_custom_call.1} parent=1 // pred_check
      _
    $region23: #{tpu_custom_call.1} parent=1 // pred_check_branch
      %2109 = sbr.rel (0) target = $region25
    $region24: #{tpu_custom_call.1} parent=1 // pred_region
      %s2111 = ssub.s32 25088, 25088
      %2112 = vsyncadd [#allocation4], %s2111
      %s2113 = sshll.u32 [#allocation7], 4
      %s2114 = int_to_ptr.vmem [resolvable:$true] %s2113
      %2119 = dma.vmem_to_hbm [thread:$0]  %s2114, 25088, %s3, [#allocation4], 128, 128, 8
    $region25: #{tpu_custom_call.1} parent=1 // pred_fallthru
      _
    // Predicated region
    $region26: #{tpu_custom_call.1} parent=1 // pred_check
      _
    $region27: #{tpu_custom_call.1} parent=1 // pred_check_branch
      %2121 = sbr.rel (0) target = $region29
    $region28: #{tpu_custom_call.1} parent=1 // pred_region
      %2122 = dma.done [#allocation4], 25088
    $region29: #{tpu_custom_call.1} parent=1 // pred_fallthru
      _
    %2123 = vsyncpa [#allocation3], 1
    %2124 = vsyncpa [#allocation6], 1
    %2125 = vsyncpa [#allocation4], 1

</llo_original>
